<compile_context>
chip_gen: v6e
topology: v6e:2x2x1
jax: 0.10.0
libtpu: 0.0.40
codegen_flags: <defaults>
</compile_context>

<pallas_src>
import jax
import jax.numpy as jnp
from jax.experimental import pallas as pl
from jax.experimental.pallas import tpu as pltpu

LANE = 128
SUBLANE = 8


def _cdiv(a, b):
    return -(-a // b)


def _round_up(n, m):
    return ((n + m - 1) // m) * m


def _pad_to(a, rows, cols):
    return jnp.pad(a, ((0, rows - a.shape[0]), (0, cols - a.shape[1])))


# -----------------------------------------------------------------------------
# Fused VAE kernel: encoder -> reparameterization -> decoder in one pass.
# mu / var / z stay in vregs/VMEM between the two halves.
# -----------------------------------------------------------------------------
def vae_kernel(x_ref, eps_ref,
               ew1_ref, eb1_ref, ew2_ref, eb2_ref, ewh_ref, ebh_ref,
               dw1_ref, db1_ref, dw2_ref, db2_ref, dwo_ref, dbo_ref,
               pred_ref, mu_ref, var_ref):
    bf16 = jnp.bfloat16
    f32 = jnp.float32
    z_dim = mu_ref.shape[-1]
    zp = ewh_ref.shape[-1] // 2            # lane-padded width of each head slab

    # ---------------- encoder ----------------
    x = x_ref[...].astype(bf16)            # f32 -> bf16 cast in-kernel (VPU)
    h = jnp.dot(x, ew1_ref[...], preferred_element_type=f32) + eb1_ref[...]
    h = jnp.maximum(h, 0.0).astype(bf16)
    h = jnp.dot(h, ew2_ref[...], preferred_element_type=f32) + eb2_ref[...]
    h = jnp.maximum(h, 0.0).astype(bf16)

    # fused mu/var head: one matmul; lanes [0:zp) = mu slab, [zp:2zp) = var slab
    heads = jnp.dot(h, ewh_ref[...], preferred_element_type=f32) + ebh_ref[...]
    mu = heads[:, :z_dim]
    var = heads[:, zp:zp + z_dim]
    mu_ref[...] = mu.astype(mu_ref.dtype)
    var_ref[...] = var.astype(var_ref.dtype)

    # ---- reparameterization: x_sample = mu + eps * exp(var / 2) (in VMEM) ----
    std = jnp.exp(var * 0.5)                                   # EUP
    z = (mu + eps_ref[...] * std).astype(bf16)

    # ---------------- decoder ----------------
    h = jnp.dot(z, dw1_ref[...], preferred_element_type=f32) + db1_ref[...]
    h = jnp.maximum(h, 0.0).astype(bf16)
    h = jnp.dot(h, dw2_ref[...], preferred_element_type=f32) + db2_ref[...]
    h = jnp.maximum(h, 0.0).astype(bf16)
    logits = jnp.dot(h, dwo_ref[...], preferred_element_type=f32) + dbo_ref[...]
    # sigmoid with the reciprocal on the EUP slot instead of VALU Newton filler
    pred = pl.reciprocal(1.0 + jnp.exp(-logits), approx=True)
    pred_ref[...] = pred.astype(pred_ref.dtype)


# -----------------------------------------------------------------------------
# Wrapper
# -----------------------------------------------------------------------------
def vae_forward(x, p, eps):
    """x: (B, input_dim) f32; p: packed params (pack_params); eps: (B, z_dim) f32."""
    input_dim, hidden_dim, z_dim, H, Zp = p["dims"]
    B = x.shape[0]
    assert x.shape == (B, input_dim) and eps.shape == (B, z_dim)

    # ----- batch tiling -----
    # * keep TB <= 512 rows (amortizes ~0.35us/grid-step) while minimizing
    #   zero-row padding (B_pad = round_up(B, TB) with TB derived from B);
    # * force >= 2 grid steps whenever B allows so ("parallel",) semantics can
    #   shard the batch across v7x's two TensorCores.
    max_tb = 512
    num_tiles = max(_cdiv(B, max_tb), 2 if B > SUBLANE else 1)
    TB = _round_up(_cdiv(B, num_tiles), SUBLANE)
    B_pad = _round_up(B, TB)
    grid = (B_pad // TB,)

    # Batch-row padding only (usually a no-op). No feature-dim pad and no
    # wrapper-side bf16 cast -> no extra HBM read/write of the activations.
    if B_pad != B:
        x = jnp.pad(x, ((0, B_pad - B), (0, 0)))
        eps = jnp.pad(eps, ((0, B_pad - B), (0, 0)))

    def row_spec(cols):
        return pl.BlockSpec((TB, cols), lambda i: (i, 0))

    def build(weight_mode):
        def res(arr):  # VMEM-resident weights/biases: same block every grid step
            if weight_mode is None:
                return pl.BlockSpec(arr.shape, lambda i: (0, 0))
            return pl.BlockSpec(arr.shape, lambda i: (0, 0),
                                pipeline_mode=weight_mode)

        in_specs = [row_spec(input_dim), row_spec(z_dim),
                    res(p["ew1"]), res(p["eb1"]), res(p["ew2"]), res(p["eb2"]),
                    res(p["ewh"]), res(p["ebh"]),
                    res(p["dw1"]), res(p["db1"]), res(p["dw2"]), res(p["db2"]),
                    res(p["dwo"]), res(p["dbo"])]
        out_specs = (row_spec(input_dim), row_spec(z_dim), row_spec(z_dim))
        out_shape = (jax.ShapeDtypeStruct((B_pad, input_dim), jnp.float32),
                     jax.ShapeDtypeStruct((B_pad, z_dim), jnp.float32),
                     jax.ShapeDtypeStruct((B_pad, z_dim), jnp.float32))
        return pl.pallas_call(
            vae_kernel,
            out_shape=out_shape,
            grid=grid,
            in_specs=in_specs,
            out_specs=out_specs,
            compiler_params=pltpu.CompilerParams(
                dimension_semantics=("parallel",),
                # above v5e's 16 MiB scoped default; safe on v6e/v7x as well
                vmem_limit_bytes=32 * 1024 * 1024,
            ),
        )

    args = (x, eps, p["ew1"], p["eb1"], p["ew2"], p["eb2"], p["ewh"], p["ebh"],
            p["dw1"], p["db1"], p["dw2"], p["db2"], p["dwo"], p["dbo"])

    # Resident weights never change across grid steps -> single-buffer them to
    # halve their VMEM footprint. Fall back to default double-buffering if this
    # JAX/Mosaic build rejects Buffered(1).
    try:
        pred, mu, var = build(pl.Buffered(1))(*args)
    except Exception:
        pred, mu, var = build(None)(*args)

    if B_pad != B:
        pred, mu, var = pred[:B], mu[:B], var[:B]
    return pred, mu, var


# -----------------------------------------------------------------------------
# Parameters
# -----------------------------------------------------------------------------
def init_raw_params(key, input_dim, hidden_dim, z_dim):
    """PyTorch nn.Linear-style uniform init; weights stored (in, out)."""
    ks = jax.random.split(key, 14)

    def linear(kw, kb, fan_in, fan_out):
        bound = float(fan_in) ** -0.5
        w = jax.random.uniform(kw, (fan_in, fan_out), jnp.float32, -bound, bound)
        b = jax.random.uniform(kb, (1, fan_out), jnp.float32, -bound, bound)
        return w, b

    p = {}
    p["ew1"], p["eb1"] = linear(ks[0], ks[1], input_dim, hidden_dim)
    p["ew2"], p["eb2"] = linear(ks[2], ks[3], hidden_dim, hidden_dim)
    p["ewmu"], p["ebmu"] = linear(ks[4], ks[5], hidden_dim, z_dim)
    p["ewvar"], p["ebvar"] = linear(ks[6], ks[7], hidden_dim, z_dim)
    p["dw1"], p["db1"] = linear(ks[8], ks[9], z_dim, hidden_dim)
    p["dw2"], p["db2"] = linear(ks[10], ks[11], hidden_dim, hidden_dim)
    p["dwo"], p["dbo"] = linear(ks[12], ks[13], hidden_dim, input_dim)
    return p


def pack_params(raw, input_dim, hidden_dim, z_dim):
    """One-time packing (outside the hot path):
      * hidden dim padded to a lane multiple (256-multiples once it exceeds 128
        so the 256-wide MXU on v6e/v7x stays fully fed; 128 is native on v5e);
      * mu/var heads fused into one (H, 2*Zp) weight, each head in its own
        lane-aligned slab;
      * input/z dims left natural (block shape == full dim is legal), so the
        wrapper never pads or copies activations;
      * weights cast to bf16 once; biases stay f32 (added on the f32 MXU acc).
    Padded rows/cols are zero, so ReLU(0 + 0) = 0 propagates and padded lanes
    never contaminate real outputs.
    """
    H = LANE if hidden_dim <= LANE else _round_up(hidden_dim, 2 * LANE)
    Zp = _round_up(z_dim, LANE)
    bf = jnp.bfloat16

    p = {
        "ew1": _pad_to(raw["ew1"], input_dim, H).astype(bf),
        "eb1": _pad_to(raw["eb1"], 1, H),
        "ew2": _pad_to(raw["ew2"], H, H).astype(bf),
        "eb2": _pad_to(raw["eb2"], 1, H),
        # fused mu/var head: (H, 2*Zp); mu in lanes [0:Zp), var in [Zp:2*Zp)
        "ewh": jnp.concatenate([_pad_to(raw["ewmu"], H, Zp),
                                _pad_to(raw["ewvar"], H, Zp)], axis=1).astype(bf),
        "ebh": jnp.concatenate([_pad_to(raw["ebmu"], 1, Zp),
                                _pad_to(raw["ebvar"], 1, Zp)], axis=1),
        "dw1": _pad_to(raw["dw1"], z_dim, H).astype(bf),
        "db1": _pad_to(raw["db1"], 1, H),
        "dw2": _pad_to(raw["dw2"], H, H).astype(bf),
        "db2": _pad_to(raw["db2"], 1, H),
        "dwo": _pad_to(raw["dwo"], H, input_dim).astype(bf),
        "dbo": raw["dbo"],
        "dims": (input_dim, hidden_dim, z_dim, H, Zp),
    }
    return p


# -----------------------------------------------------------------------------
# Pure-JAX reference (same bf16-inputs / f32-accumulation numerics)
# -----------------------------------------------------------------------------
def vae_ref(x, raw, eps):
    bf = jnp.bfloat16

    def lin(a, w, b):
        return jnp.dot(a.astype(bf), w.astype(bf),
                       preferred_element_type=jnp.float32) + b

    h = jnp.maximum(lin(x, raw["ew1"], raw["eb1"]), 0.0)
    h = jnp.maximum(lin(h, raw["ew2"], raw["eb2"]), 0.0)
    z_mu = lin(h, raw["ewmu"], raw["ebmu"])
    z_var = lin(h, raw["ewvar"], raw["ebvar"])
    z = z_mu + eps * jnp.exp(0.5 * z_var)
    h = jnp.maximum(lin(z, raw["dw1"], raw["db1"]), 0.0)
    h = jnp.maximum(lin(h, raw["dw2"], raw["db2"]), 0.0)
    logits = lin(h, raw["dwo"], raw["dbo"])
    return 1.0 / (1.0 + jnp.exp(-logits)), z_mu, z_var


if __name__ == "__main__":
    B, input_dim, hidden_dim, z_dim = 8, 64, 32, 16

    key = jax.random.PRNGKey(0)
    kx, kp, ke = jax.random.split(key, 3)
    x = jax.random.normal(kx, (B, input_dim), dtype=jnp.float32)
    raw = init_raw_params(kp, input_dim, hidden_dim, z_dim)
    packed = pack_params(raw, input_dim, hidden_dim, z_dim)
    # torch.randn_like equivalent: deterministic eps supplied from outside the kernel
    eps = jax.random.normal(ke, (B, z_dim), dtype=jnp.float32)

    predicted, z_mu, z_var = vae_forward(x, packed, eps)
    jax.block_until_ready((predicted, z_mu, z_var))

    pred_r, mu_r, var_r = vae_ref(x, raw, eps)
    assert predicted.shape == (B, input_dim)
    assert z_mu.shape == (B, z_dim) and z_var.shape == (B, z_dim)
    assert jnp.allclose(z_mu, mu_r, atol=1e-2, rtol=1e-2)
    assert jnp.allclose(z_var, var_r, atol=1e-2, rtol=1e-2)
    assert jnp.allclose(predicted, pred_r, atol=1e-2, rtol=1e-2)

    print("KERNEL_OK")
</pallas_src>

<mosaic_0001>
module attributes {stable_mosaic.version = 11 : i64} {
  func.func @vae_kernel(%arg0: i32, %arg1: memref<8x64xf32, #tpu.memory_space<vmem>>, %arg2: memref<8x16xf32, #tpu.memory_space<vmem>>, %arg3: memref<64x128xbf16, #tpu.memory_space<vmem>>, %arg4: memref<1x128xf32, #tpu.memory_space<vmem>>, %arg5: memref<128x128xbf16, #tpu.memory_space<vmem>>, %arg6: memref<1x128xf32, #tpu.memory_space<vmem>>, %arg7: memref<128x256xbf16, #tpu.memory_space<vmem>>, %arg8: memref<1x256xf32, #tpu.memory_space<vmem>>, %arg9: memref<16x128xbf16, #tpu.memory_space<vmem>>, %arg10: memref<1x128xf32, #tpu.memory_space<vmem>>, %arg11: memref<128x128xbf16, #tpu.memory_space<vmem>>, %arg12: memref<1x128xf32, #tpu.memory_space<vmem>>, %arg13: memref<128x64xbf16, #tpu.memory_space<vmem>>, %arg14: memref<1x64xf32, #tpu.memory_space<vmem>>, %arg15: memref<8x64xf32, #tpu.memory_space<vmem>>, %arg16: memref<8x16xf32, #tpu.memory_space<vmem>>, %arg17: memref<8x16xf32, #tpu.memory_space<vmem>>) attributes {dimension_semantics = [#tpu.dimension_semantics<parallel>], iteration_bounds = array<i64: 1>, scalar_prefetch = 0 : i64, scratch_operands = 0 : i64, tpu.core_type = #tpu.core_type<tc>, window_params = [{transform_indices = @transform_0, window_bounds = array<i64: 8, 64>}, {transform_indices = @transform_1, window_bounds = array<i64: 8, 16>}, {pipeline_mode = #tpu.pipeline_mode<synchronous>, transform_indices = @transform_2, window_bounds = array<i64: 64, 128>}, {pipeline_mode = #tpu.pipeline_mode<synchronous>, transform_indices = @transform_3, window_bounds = array<i64: 1, 128>}, {pipeline_mode = #tpu.pipeline_mode<synchronous>, transform_indices = @transform_4, window_bounds = array<i64: 128, 128>}, {pipeline_mode = #tpu.pipeline_mode<synchronous>, transform_indices = @transform_5, window_bounds = array<i64: 1, 128>}, {pipeline_mode = #tpu.pipeline_mode<synchronous>, transform_indices = @transform_6, window_bounds = array<i64: 128, 256>}, {pipeline_mode = #tpu.pipeline_mode<synchronous>, transform_indices = @transform_7, window_bounds = array<i64: 1, 256>}, {pipeline_mode = #tpu.pipeline_mode<synchronous>, transform_indices = @transform_8, window_bounds = array<i64: 16, 128>}, {pipeline_mode = #tpu.pipeline_mode<synchronous>, transform_indices = @transform_9, window_bounds = array<i64: 1, 128>}, {pipeline_mode = #tpu.pipeline_mode<synchronous>, transform_indices = @transform_10, window_bounds = array<i64: 128, 128>}, {pipeline_mode = #tpu.pipeline_mode<synchronous>, transform_indices = @transform_11, window_bounds = array<i64: 1, 128>}, {pipeline_mode = #tpu.pipeline_mode<synchronous>, transform_indices = @transform_12, window_bounds = array<i64: 128, 64>}, {pipeline_mode = #tpu.pipeline_mode<synchronous>, transform_indices = @transform_13, window_bounds = array<i64: 1, 64>}, {transform_indices = @transform_14, window_bounds = array<i64: 8, 64>}, {transform_indices = @transform_15, window_bounds = array<i64: 8, 16>}, {transform_indices = @transform_16, window_bounds = array<i64: 8, 16>}]} {
    %c0 = arith.constant 0 : index
    %c0_0 = arith.constant 0 : index
    %0 = vector.load %arg1[%c0, %c0_0] : memref<8x64xf32, #tpu.memory_space<vmem>>, vector<8x64xf32>
    %1 = arith.truncf %0 : vector<8x64xf32> to vector<8x64xbf16>
    %c0_1 = arith.constant 0 : index
    %c0_2 = arith.constant 0 : index
    %2 = vector.load %arg3[%c0_1, %c0_2] : memref<64x128xbf16, #tpu.memory_space<vmem>>, vector<64x128xbf16>
    %cst = arith.constant dense<0.000000e+00> : vector<8x128xf32>
    %3 = tpu.matmul %1, %2, %cst {dimension_numbers = #tpu.dot_dimension_numbers<[1], [0], [0], [1], [0, 0, 1, 1], [], []>} : vector<8x64xbf16>, vector<64x128xbf16>, vector<8x128xf32> -> vector<8x128xf32>
    %c0_3 = arith.constant 0 : index
    %c0_4 = arith.constant 0 : index
    %4 = vector.load %arg4[%c0_3, %c0_4] : memref<1x128xf32, #tpu.memory_space<vmem>>, vector<1x128xf32>
    %5 = vector.broadcast %4 : vector<1x128xf32> to vector<8x128xf32>
    %6 = arith.addf %3, %5 : vector<8x128xf32>
    %cst_5 = arith.constant 0.000000e+00 : f32
    %7 = vector.broadcast %cst_5 : f32 to vector<8x128xf32>
    %8 = arith.maximumf %6, %7 : vector<8x128xf32>
    %9 = arith.truncf %8 : vector<8x128xf32> to vector<8x128xbf16>
    %c0_6 = arith.constant 0 : index
    %c0_7 = arith.constant 0 : index
    %10 = vector.load %arg5[%c0_6, %c0_7] : memref<128x128xbf16, #tpu.memory_space<vmem>>, vector<128x128xbf16>
    %cst_8 = arith.constant dense<0.000000e+00> : vector<8x128xf32>
    %11 = tpu.matmul %9, %10, %cst_8 {dimension_numbers = #tpu.dot_dimension_numbers<[1], [0], [0], [1], [0, 0, 1, 1], [], []>} : vector<8x128xbf16>, vector<128x128xbf16>, vector<8x128xf32> -> vector<8x128xf32>
    %c0_9 = arith.constant 0 : index
    %c0_10 = arith.constant 0 : index
    %12 = vector.load %arg6[%c0_9, %c0_10] : memref<1x128xf32, #tpu.memory_space<vmem>>, vector<1x128xf32>
    %13 = vector.broadcast %12 : vector<1x128xf32> to vector<8x128xf32>
    %14 = arith.addf %11, %13 : vector<8x128xf32>
    %cst_11 = arith.constant 0.000000e+00 : f32
    %15 = vector.broadcast %cst_11 : f32 to vector<8x128xf32>
    %16 = arith.maximumf %14, %15 : vector<8x128xf32>
    %17 = arith.truncf %16 : vector<8x128xf32> to vector<8x128xbf16>
    %c0_12 = arith.constant 0 : index
    %c0_13 = arith.constant 0 : index
    %18 = vector.load %arg7[%c0_12, %c0_13] : memref<128x256xbf16, #tpu.memory_space<vmem>>, vector<128x256xbf16>
    %cst_14 = arith.constant dense<0.000000e+00> : vector<8x256xf32>
    %19 = tpu.matmul %17, %18, %cst_14 {dimension_numbers = #tpu.dot_dimension_numbers<[1], [0], [0], [1], [0, 0, 1, 1], [], []>} : vector<8x128xbf16>, vector<128x256xbf16>, vector<8x256xf32> -> vector<8x256xf32>
    %c0_15 = arith.constant 0 : index
    %c0_16 = arith.constant 0 : index
    %20 = vector.load %arg8[%c0_15, %c0_16] : memref<1x256xf32, #tpu.memory_space<vmem>>, vector<1x256xf32>
    %21 = vector.broadcast %20 : vector<1x256xf32> to vector<8x256xf32>
    %22 = arith.addf %19, %21 : vector<8x256xf32>
    %23 = vector.extract_strided_slice %22 {offsets = [0, 0], sizes = [8, 16], strides = [1, 1]} : vector<8x256xf32> to vector<8x16xf32>
    %24 = vector.extract_strided_slice %22 {offsets = [0, 128], sizes = [8, 16], strides = [1, 1]} : vector<8x256xf32> to vector<8x16xf32>
    %c0_17 = arith.constant 0 : index
    %c0_18 = arith.constant 0 : index
    %25 = vector.load %arg16[%c0_17, %c0_18] : memref<8x16xf32, #tpu.memory_space<vmem>>, vector<8x16xf32>
    tpu.vector_store %arg16[%c0_17, %c0_18], %23 {strides = array<i32>} : memref<8x16xf32, #tpu.memory_space<vmem>>, vector<8x16xf32>,
    %c0_19 = arith.constant 0 : index
    %c0_20 = arith.constant 0 : index
    %26 = vector.load %arg17[%c0_19, %c0_20] : memref<8x16xf32, #tpu.memory_space<vmem>>, vector<8x16xf32>
    tpu.vector_store %arg17[%c0_19, %c0_20], %24 {strides = array<i32>} : memref<8x16xf32, #tpu.memory_space<vmem>>, vector<8x16xf32>,
    %cst_21 = arith.constant 5.000000e-01 : f32
    %27 = vector.broadcast %cst_21 : f32 to vector<8x16xf32>
    %28 = arith.mulf %24, %27 : vector<8x16xf32>
    %29 = math.exp %28 : vector<8x16xf32>
    %c0_22 = arith.constant 0 : index
    %c0_23 = arith.constant 0 : index
    %30 = vector.load %arg2[%c0_22, %c0_23] : memref<8x16xf32, #tpu.memory_space<vmem>>, vector<8x16xf32>
    %31 = arith.mulf %30, %29 : vector<8x16xf32>
    %32 = arith.addf %23, %31 : vector<8x16xf32>
    %33 = arith.truncf %32 : vector<8x16xf32> to vector<8x16xbf16>
    %c0_24 = arith.constant 0 : index
    %c0_25 = arith.constant 0 : index
    %34 = vector.load %arg9[%c0_24, %c0_25] : memref<16x128xbf16, #tpu.memory_space<vmem>>, vector<16x128xbf16>
    %cst_26 = arith.constant dense<0.000000e+00> : vector<8x128xf32>
    %35 = tpu.matmul %33, %34, %cst_26 {dimension_numbers = #tpu.dot_dimension_numbers<[1], [0], [0], [1], [0, 0, 1, 1], [], []>} : vector<8x16xbf16>, vector<16x128xbf16>, vector<8x128xf32> -> vector<8x128xf32>
    %c0_27 = arith.constant 0 : index
    %c0_28 = arith.constant 0 : index
    %36 = vector.load %arg10[%c0_27, %c0_28] : memref<1x128xf32, #tpu.memory_space<vmem>>, vector<1x128xf32>
    %37 = vector.broadcast %36 : vector<1x128xf32> to vector<8x128xf32>
    %38 = arith.addf %35, %37 : vector<8x128xf32>
    %cst_29 = arith.constant 0.000000e+00 : f32
    %39 = vector.broadcast %cst_29 : f32 to vector<8x128xf32>
    %40 = arith.maximumf %38, %39 : vector<8x128xf32>
    %41 = arith.truncf %40 : vector<8x128xf32> to vector<8x128xbf16>
    %c0_30 = arith.constant 0 : index
    %c0_31 = arith.constant 0 : index
    %42 = vector.load %arg11[%c0_30, %c0_31] : memref<128x128xbf16, #tpu.memory_space<vmem>>, vector<128x128xbf16>
    %cst_32 = arith.constant dense<0.000000e+00> : vector<8x128xf32>
    %43 = tpu.matmul %41, %42, %cst_32 {dimension_numbers = #tpu.dot_dimension_numbers<[1], [0], [0], [1], [0, 0, 1, 1], [], []>} : vector<8x128xbf16>, vector<128x128xbf16>, vector<8x128xf32> -> vector<8x128xf32>
    %c0_33 = arith.constant 0 : index
    %c0_34 = arith.constant 0 : index
    %44 = vector.load %arg12[%c0_33, %c0_34] : memref<1x128xf32, #tpu.memory_space<vmem>>, vector<1x128xf32>
    %45 = vector.broadcast %44 : vector<1x128xf32> to vector<8x128xf32>
    %46 = arith.addf %43, %45 : vector<8x128xf32>
    %cst_35 = arith.constant 0.000000e+00 : f32
    %47 = vector.broadcast %cst_35 : f32 to vector<8x128xf32>
    %48 = arith.maximumf %46, %47 : vector<8x128xf32>
    %49 = arith.truncf %48 : vector<8x128xf32> to vector<8x128xbf16>
    %c0_36 = arith.constant 0 : index
    %c0_37 = arith.constant 0 : index
    %50 = vector.load %arg13[%c0_36, %c0_37] : memref<128x64xbf16, #tpu.memory_space<vmem>>, vector<128x64xbf16>
    %cst_38 = arith.constant dense<0.000000e+00> : vector<8x64xf32>
    %51 = tpu.matmul %49, %50, %cst_38 {dimension_numbers = #tpu.dot_dimension_numbers<[1], [0], [0], [1], [0, 0, 1, 1], [], []>} : vector<8x128xbf16>, vector<128x64xbf16>, vector<8x64xf32> -> vector<8x64xf32>
    %c0_39 = arith.constant 0 : index
    %c0_40 = arith.constant 0 : index
    %52 = vector.load %arg14[%c0_39, %c0_40] : memref<1x64xf32, #tpu.memory_space<vmem>>, vector<1x64xf32>
    %53 = vector.broadcast %52 : vector<1x64xf32> to vector<8x64xf32>
    %54 = arith.addf %51, %53 : vector<8x64xf32>
    %cst_41 = arith.constant 0.000000e+00 : f32
    %55 = vector.broadcast %cst_41 : f32 to vector<8x64xf32>
    %56 = arith.subf %55, %54 : vector<8x64xf32>
    %57 = math.exp %56 : vector<8x64xf32>
    %cst_42 = arith.constant 1.000000e+00 : f32
    %58 = vector.broadcast %cst_42 : f32 to vector<8x64xf32>
    %59 = arith.addf %58, %57 : vector<8x64xf32>
    %60 = tpu.reciprocal %59 {approx = true} : vector<8x64xf32> -> vector<8x64xf32>
    %c0_43 = arith.constant 0 : index
    %c0_44 = arith.constant 0 : index
    %61 = vector.load %arg15[%c0_43, %c0_44] : memref<8x64xf32, #tpu.memory_space<vmem>>, vector<8x64xf32>
    tpu.vector_store %arg15[%c0_43, %c0_44], %60 {strides = array<i32>} : memref<8x64xf32, #tpu.memory_space<vmem>>, vector<8x64xf32>,
    return
  }
  func.func @transform_0(%arg0: i32) -> (i32, i32) {
    %c0_i32 = arith.constant 0 : i32
    %c0_i32_0 = arith.constant 0 : i32
    return %arg0, %c0_i32 : i32, i32
  }
  func.func @transform_1(%arg0: i32) -> (i32, i32) {
    %c0_i32 = arith.constant 0 : i32
    %c0_i32_0 = arith.constant 0 : i32
    return %arg0, %c0_i32 : i32, i32
  }
  func.func @transform_2(%arg0: i32) -> (i32, i32) {
    %c0_i32 = arith.constant 0 : i32
    %c0_i32_0 = arith.constant 0 : i32
    %c0_i32_1 = arith.constant 0 : i32
    return %c0_i32, %c0_i32_0 : i32, i32
  }
  func.func @transform_3(%arg0: i32) -> (i32, i32) {
    %c0_i32 = arith.constant 0 : i32
    %c0_i32_0 = arith.constant 0 : i32
    %c0_i32_1 = arith.constant 0 : i32
    return %c0_i32, %c0_i32_0 : i32, i32
  }
  func.func @transform_4(%arg0: i32) -> (i32, i32) {
    %c0_i32 = arith.constant 0 : i32
    %c0_i32_0 = arith.constant 0 : i32
    %c0_i32_1 = arith.constant 0 : i32
    return %c0_i32, %c0_i32_0 : i32, i32
  }
  func.func @transform_5(%arg0: i32) -> (i32, i32) {
    %c0_i32 = arith.constant 0 : i32
    %c0_i32_0 = arith.constant 0 : i32
    %c0_i32_1 = arith.constant 0 : i32
    return %c0_i32, %c0_i32_0 : i32, i32
  }
  func.func @transform_6(%arg0: i32) -> (i32, i32) {
    %c0_i32 = arith.constant 0 : i32
    %c0_i32_0 = arith.constant 0 : i32
    %c0_i32_1 = arith.constant 0 : i32
    return %c0_i32, %c0_i32_0 : i32, i32
  }
  func.func @transform_7(%arg0: i32) -> (i32, i32) {
    %c0_i32 = arith.constant 0 : i32
    %c0_i32_0 = arith.constant 0 : i32
    %c0_i32_1 = arith.constant 0 : i32
    return %c0_i32, %c0_i32_0 : i32, i32
  }
  func.func @transform_8(%arg0: i32) -> (i32, i32) {
    %c0_i32 = arith.constant 0 : i32
    %c0_i32_0 = arith.constant 0 : i32
    %c0_i32_1 = arith.constant 0 : i32
    return %c0_i32, %c0_i32_0 : i32, i32
  }
  func.func @transform_9(%arg0: i32) -> (i32, i32) {
    %c0_i32 = arith.constant 0 : i32
    %c0_i32_0 = arith.constant 0 : i32
    %c0_i32_1 = arith.constant 0 : i32
    return %c0_i32, %c0_i32_0 : i32, i32
  }
  func.func @transform_10(%arg0: i32) -> (i32, i32) {
    %c0_i32 = arith.constant 0 : i32
    %c0_i32_0 = arith.constant 0 : i32
    %c0_i32_1 = arith.constant 0 : i32
    return %c0_i32, %c0_i32_0 : i32, i32
  }
  func.func @transform_11(%arg0: i32) -> (i32, i32) {
    %c0_i32 = arith.constant 0 : i32
    %c0_i32_0 = arith.constant 0 : i32
    %c0_i32_1 = arith.constant 0 : i32
    return %c0_i32, %c0_i32_0 : i32, i32
  }
  func.func @transform_12(%arg0: i32) -> (i32, i32) {
    %c0_i32 = arith.constant 0 : i32
    %c0_i32_0 = arith.constant 0 : i32
    %c0_i32_1 = arith.constant 0 : i32
    return %c0_i32, %c0_i32_0 : i32, i32
  }
  func.func @transform_13(%arg0: i32) -> (i32, i32) {
    %c0_i32 = arith.constant 0 : i32
    %c0_i32_0 = arith.constant 0 : i32
    %c0_i32_1 = arith.constant 0 : i32
    return %c0_i32, %c0_i32_0 : i32, i32
  }
  func.func @transform_14(%arg0: i32) -> (i32, i32) {
    %c0_i32 = arith.constant 0 : i32
    %c0_i32_0 = arith.constant 0 : i32
    return %arg0, %c0_i32 : i32, i32
  }
  func.func @transform_15(%arg0: i32) -> (i32, i32) {
    %c0_i32 = arith.constant 0 : i32
    %c0_i32_0 = arith.constant 0 : i32
    return %arg0, %c0_i32 : i32, i32
  }
  func.func @transform_16(%arg0: i32) -> (i32, i32) {
    %c0_i32 = arith.constant 0 : i32
    %c0_i32_0 = arith.constant 0 : i32
    return %arg0, %c0_i32 : i32, i32
  }
}

module attributes {stable_mosaic.version = 11 : i64} {
  func.func @vae_kernel(%arg0: i32, %arg1: memref<8x64xf32, #tpu.memory_space<vmem>>, %arg2: memref<8x16xf32, #tpu.memory_space<vmem>>, %arg3: memref<64x128xbf16, #tpu.memory_space<vmem>>, %arg4: memref<1x128xf32, #tpu.memory_space<vmem>>, %arg5: memref<128x128xbf16, #tpu.memory_space<vmem>>, %arg6: memref<1x128xf32, #tpu.memory_space<vmem>>, %arg7: memref<128x256xbf16, #tpu.memory_space<vmem>>, %arg8: memref<1x256xf32, #tpu.memory_space<vmem>>, %arg9: memref<16x128xbf16, #tpu.memory_space<vmem>>, %arg10: memref<1x128xf32, #tpu.memory_space<vmem>>, %arg11: memref<128x128xbf16, #tpu.memory_space<vmem>>, %arg12: memref<1x128xf32, #tpu.memory_space<vmem>>, %arg13: memref<128x64xbf16, #tpu.memory_space<vmem>>, %arg14: memref<1x64xf32, #tpu.memory_space<vmem>>, %arg15: memref<8x64xf32, #tpu.memory_space<vmem>>, %arg16: memref<8x16xf32, #tpu.memory_space<vmem>>, %arg17: memref<8x16xf32, #tpu.memory_space<vmem>>) attributes {dimension_semantics = [#tpu.dimension_semantics<parallel>], iteration_bounds = array<i64: 1>, scalar_prefetch = 0 : i64, scratch_operands = 0 : i64, tpu.core_type = #tpu.core_type<tc>, window_params = [{transform_indices = @transform_0, window_bounds = array<i64: 8, 64>}, {transform_indices = @transform_1, window_bounds = array<i64: 8, 16>}, {pipeline_mode = #tpu.pipeline_mode<synchronous>, transform_indices = @transform_2, window_bounds = array<i64: 64, 128>}, {pipeline_mode = #tpu.pipeline_mode<synchronous>, transform_indices = @transform_3, window_bounds = array<i64: 1, 128>}, {pipeline_mode = #tpu.pipeline_mode<synchronous>, transform_indices = @transform_4, window_bounds = array<i64: 128, 128>}, {pipeline_mode = #tpu.pipeline_mode<synchronous>, transform_indices = @transform_5, window_bounds = array<i64: 1, 128>}, {pipeline_mode = #tpu.pipeline_mode<synchronous>, transform_indices = @transform_6, window_bounds = array<i64: 128, 256>}, {pipeline_mode = #tpu.pipeline_mode<synchronous>, transform_indices = @transform_7, window_bounds = array<i64: 1, 256>}, {pipeline_mode = #tpu.pipeline_mode<synchronous>, transform_indices = @transform_8, window_bounds = array<i64: 16, 128>}, {pipeline_mode = #tpu.pipeline_mode<synchronous>, transform_indices = @transform_9, window_bounds = array<i64: 1, 128>}, {pipeline_mode = #tpu.pipeline_mode<synchronous>, transform_indices = @transform_10, window_bounds = array<i64: 128, 128>}, {pipeline_mode = #tpu.pipeline_mode<synchronous>, transform_indices = @transform_11, window_bounds = array<i64: 1, 128>}, {pipeline_mode = #tpu.pipeline_mode<synchronous>, transform_indices = @transform_12, window_bounds = array<i64: 128, 64>}, {pipeline_mode = #tpu.pipeline_mode<synchronous>, transform_indices = @transform_13, window_bounds = array<i64: 1, 64>}, {transform_indices = @transform_14, window_bounds = array<i64: 8, 64>}, {transform_indices = @transform_15, window_bounds = array<i64: 8, 16>}, {transform_indices = @transform_16, window_bounds = array<i64: 8, 16>}]} {
    %c0 = arith.constant 0 : index
    %c0_0 = arith.constant 0 : index
    %0 = vector.load %arg1[%c0, %c0_0] : memref<8x64xf32, #tpu.memory_space<vmem>>, vector<8x64xf32>
    %1 = arith.truncf %0 : vector<8x64xf32> to vector<8x64xbf16>
    %c0_1 = arith.constant 0 : index
    %c0_2 = arith.constant 0 : index
    %2 = vector.load %arg3[%c0_1, %c0_2] : memref<64x128xbf16, #tpu.memory_space<vmem>>, vector<64x128xbf16>
    %cst = arith.constant dense<0.000000e+00> : vector<8x128xf32>
    %3 = tpu.matmul %1, %2, %cst {dimension_numbers = #tpu.dot_dimension_numbers<[1], [0], [0], [1], [0, 0, 1, 1], [], []>} : vector<8x64xbf16>, vector<64x128xbf16>, vector<8x128xf32> -> vector<8x128xf32>
    %c0_3 = arith.constant 0 : index
    %c0_4 = arith.constant 0 : index
    %4 = vector.load %arg4[%c0_3, %c0_4] : memref<1x128xf32, #tpu.memory_space<vmem>>, vector<1x128xf32>
    %5 = vector.broadcast %4 : vector<1x128xf32> to vector<8x128xf32>
    %6 = arith.addf %3, %5 : vector<8x128xf32>
    %cst_5 = arith.constant 0.000000e+00 : f32
    %7 = vector.broadcast %cst_5 : f32 to vector<8x128xf32>
    %8 = arith.maximumf %6, %7 : vector<8x128xf32>
    %9 = arith.truncf %8 : vector<8x128xf32> to vector<8x128xbf16>
    %c0_6 = arith.constant 0 : index
    %c0_7 = arith.constant 0 : index
    %10 = vector.load %arg5[%c0_6, %c0_7] : memref<128x128xbf16, #tpu.memory_space<vmem>>, vector<128x128xbf16>
    %cst_8 = arith.constant dense<0.000000e+00> : vector<8x128xf32>
    %11 = tpu.matmul %9, %10, %cst_8 {dimension_numbers = #tpu.dot_dimension_numbers<[1], [0], [0], [1], [0, 0, 1, 1], [], []>} : vector<8x128xbf16>, vector<128x128xbf16>, vector<8x128xf32> -> vector<8x128xf32>
    %c0_9 = arith.constant 0 : index
    %c0_10 = arith.constant 0 : index
    %12 = vector.load %arg6[%c0_9, %c0_10] : memref<1x128xf32, #tpu.memory_space<vmem>>, vector<1x128xf32>
    %13 = vector.broadcast %12 : vector<1x128xf32> to vector<8x128xf32>
    %14 = arith.addf %11, %13 : vector<8x128xf32>
    %cst_11 = arith.constant 0.000000e+00 : f32
    %15 = vector.broadcast %cst_11 : f32 to vector<8x128xf32>
    %16 = arith.maximumf %14, %15 : vector<8x128xf32>
    %17 = arith.truncf %16 : vector<8x128xf32> to vector<8x128xbf16>
    %c0_12 = arith.constant 0 : index
    %c0_13 = arith.constant 0 : index
    %18 = vector.load %arg7[%c0_12, %c0_13] : memref<128x256xbf16, #tpu.memory_space<vmem>>, vector<128x256xbf16>
    %cst_14 = arith.constant dense<0.000000e+00> : vector<8x256xf32>
    %19 = tpu.matmul %17, %18, %cst_14 {dimension_numbers = #tpu.dot_dimension_numbers<[1], [0], [0], [1], [0, 0, 1, 1], [], []>} : vector<8x128xbf16>, vector<128x256xbf16>, vector<8x256xf32> -> vector<8x256xf32>
    %c0_15 = arith.constant 0 : index
    %c0_16 = arith.constant 0 : index
    %20 = vector.load %arg8[%c0_15, %c0_16] : memref<1x256xf32, #tpu.memory_space<vmem>>, vector<1x256xf32>
    %21 = vector.broadcast %20 : vector<1x256xf32> to vector<8x256xf32>
    %22 = arith.addf %19, %21 : vector<8x256xf32>
    %23 = vector.extract_strided_slice %22 {offsets = [0, 0], sizes = [8, 16], strides = [1, 1]} : vector<8x256xf32> to vector<8x16xf32>
    %24 = vector.extract_strided_slice %22 {offsets = [0, 128], sizes = [8, 16], strides = [1, 1]} : vector<8x256xf32> to vector<8x16xf32>
    %c0_17 = arith.constant 0 : index
    %c0_18 = arith.constant 0 : index
    %25 = vector.load %arg16[%c0_17, %c0_18] : memref<8x16xf32, #tpu.memory_space<vmem>>, vector<8x16xf32>
    tpu.vector_store %arg16[%c0_17, %c0_18], %23 {strides = array<i32>} : memref<8x16xf32, #tpu.memory_space<vmem>>, vector<8x16xf32>,
    %c0_19 = arith.constant 0 : index
    %c0_20 = arith.constant 0 : index
    %26 = vector.load %arg17[%c0_19, %c0_20] : memref<8x16xf32, #tpu.memory_space<vmem>>, vector<8x16xf32>
    tpu.vector_store %arg17[%c0_19, %c0_20], %24 {strides = array<i32>} : memref<8x16xf32, #tpu.memory_space<vmem>>, vector<8x16xf32>,
    %cst_21 = arith.constant 5.000000e-01 : f32
    %27 = vector.broadcast %cst_21 : f32 to vector<8x16xf32>
    %28 = arith.mulf %24, %27 : vector<8x16xf32>
    %29 = math.exp %28 : vector<8x16xf32>
    %c0_22 = arith.constant 0 : index
    %c0_23 = arith.constant 0 : index
    %30 = vector.load %arg2[%c0_22, %c0_23] : memref<8x16xf32, #tpu.memory_space<vmem>>, vector<8x16xf32>
    %31 = arith.mulf %30, %29 : vector<8x16xf32>
    %32 = arith.addf %23, %31 : vector<8x16xf32>
    %33 = arith.truncf %32 : vector<8x16xf32> to vector<8x16xbf16>
    %c0_24 = arith.constant 0 : index
    %c0_25 = arith.constant 0 : index
    %34 = vector.load %arg9[%c0_24, %c0_25] : memref<16x128xbf16, #tpu.memory_space<vmem>>, vector<16x128xbf16>
    %cst_26 = arith.constant dense<0.000000e+00> : vector<8x128xf32>
    %35 = tpu.matmul %33, %34, %cst_26 {dimension_numbers = #tpu.dot_dimension_numbers<[1], [0], [0], [1], [0, 0, 1, 1], [], []>} : vector<8x16xbf16>, vector<16x128xbf16>, vector<8x128xf32> -> vector<8x128xf32>
    %c0_27 = arith.constant 0 : index
    %c0_28 = arith.constant 0 : index
    %36 = vector.load %arg10[%c0_27, %c0_28] : memref<1x128xf32, #tpu.memory_space<vmem>>, vector<1x128xf32>
    %37 = vector.broadcast %36 : vector<1x128xf32> to vector<8x128xf32>
    %38 = arith.addf %35, %37 : vector<8x128xf32>
    %cst_29 = arith.constant 0.000000e+00 : f32
    %39 = vector.broadcast %cst_29 : f32 to vector<8x128xf32>
    %40 = arith.maximumf %38, %39 : vector<8x128xf32>
    %41 = arith.truncf %40 : vector<8x128xf32> to vector<8x128xbf16>
    %c0_30 = arith.constant 0 : index
    %c0_31 = arith.constant 0 : index
    %42 = vector.load %arg11[%c0_30, %c0_31] : memref<128x128xbf16, #tpu.memory_space<vmem>>, vector<128x128xbf16>
    %cst_32 = arith.constant dense<0.000000e+00> : vector<8x128xf32>
    %43 = tpu.matmul %41, %42, %cst_32 {dimension_numbers = #tpu.dot_dimension_numbers<[1], [0], [0], [1], [0, 0, 1, 1], [], []>} : vector<8x128xbf16>, vector<128x128xbf16>, vector<8x128xf32> -> vector<8x128xf32>
    %c0_33 = arith.constant 0 : index
    %c0_34 = arith.constant 0 : index
    %44 = vector.load %arg12[%c0_33, %c0_34] : memref<1x128xf32, #tpu.memory_space<vmem>>, vector<1x128xf32>
    %45 = vector.broadcast %44 : vector<1x128xf32> to vector<8x128xf32>
    %46 = arith.addf %43, %45 : vector<8x128xf32>
    %cst_35 = arith.constant 0.000000e+00 : f32
    %47 = vector.broadcast %cst_35 : f32 to vector<8x128xf32>
    %48 = arith.maximumf %46, %47 : vector<8x128xf32>
    %49 = arith.truncf %48 : vector<8x128xf32> to vector<8x128xbf16>
    %c0_36 = arith.constant 0 : index
    %c0_37 = arith.constant 0 : index
    %50 = vector.load %arg13[%c0_36, %c0_37] : memref<128x64xbf16, #tpu.memory_space<vmem>>, vector<128x64xbf16>
    %cst_38 = arith.constant dense<0.000000e+00> : vector<8x64xf32>
    %51 = tpu.matmul %49, %50, %cst_38 {dimension_numbers = #tpu.dot_dimension_numbers<[1], [0], [0], [1], [0, 0, 1, 1], [], []>} : vector<8x128xbf16>, vector<128x64xbf16>, vector<8x64xf32> -> vector<8x64xf32>
    %c0_39 = arith.constant 0 : index
    %c0_40 = arith.constant 0 : index
    %52 = vector.load %arg14[%c0_39, %c0_40] : memref<1x64xf32, #tpu.memory_space<vmem>>, vector<1x64xf32>
    %53 = vector.broadcast %52 : vector<1x64xf32> to vector<8x64xf32>
    %54 = arith.addf %51, %53 : vector<8x64xf32>
    %cst_41 = arith.constant 0.000000e+00 : f32
    %55 = vector.broadcast %cst_41 : f32 to vector<8x64xf32>
    %56 = arith.subf %55, %54 : vector<8x64xf32>
    %57 = math.exp %56 : vector<8x64xf32>
    %cst_42 = arith.constant 1.000000e+00 : f32
    %58 = vector.broadcast %cst_42 : f32 to vector<8x64xf32>
    %59 = arith.addf %58, %57 : vector<8x64xf32>
    %60 = tpu.reciprocal %59 {approx = true} : vector<8x64xf32> -> vector<8x64xf32>
    %c0_43 = arith.constant 0 : index
    %c0_44 = arith.constant 0 : index
    %61 = vector.load %arg15[%c0_43, %c0_44] : memref<8x64xf32, #tpu.memory_space<vmem>>, vector<8x64xf32>
    tpu.vector_store %arg15[%c0_43, %c0_44], %60 {strides = array<i32>} : memref<8x64xf32, #tpu.memory_space<vmem>>, vector<8x64xf32>,
    return
  }
  func.func @transform_0(%arg0: i32) -> (i32, i32) {
    %c0_i32 = arith.constant 0 : i32
    %c0_i32_0 = arith.constant 0 : i32
    return %arg0, %c0_i32 : i32, i32
  }
  func.func @transform_1(%arg0: i32) -> (i32, i32) {
    %c0_i32 = arith.constant 0 : i32
    %c0_i32_0 = arith.constant 0 : i32
    return %arg0, %c0_i32 : i32, i32
  }
  func.func @transform_2(%arg0: i32) -> (i32, i32) {
    %c0_i32 = arith.constant 0 : i32
    %c0_i32_0 = arith.constant 0 : i32
    %c0_i32_1 = arith.constant 0 : i32
    return %c0_i32, %c0_i32_0 : i32, i32
  }
  func.func @transform_3(%arg0: i32) -> (i32, i32) {
    %c0_i32 = arith.constant 0 : i32
    %c0_i32_0 = arith.constant 0 : i32
    %c0_i32_1 = arith.constant 0 : i32
    return %c0_i32, %c0_i32_0 : i32, i32
  }
  func.func @transform_4(%arg0: i32) -> (i32, i32) {
    %c0_i32 = arith.constant 0 : i32
    %c0_i32_0 = arith.constant 0 : i32
    %c0_i32_1 = arith.constant 0 : i32
    return %c0_i32, %c0_i32_0 : i32, i32
  }
  func.func @transform_5(%arg0: i32) -> (i32, i32) {
    %c0_i32 = arith.constant 0 : i32
    %c0_i32_0 = arith.constant 0 : i32
    %c0_i32_1 = arith.constant 0 : i32
    return %c0_i32, %c0_i32_0 : i32, i32
  }
  func.func @transform_6(%arg0: i32) -> (i32, i32) {
    %c0_i32 = arith.constant 0 : i32
    %c0_i32_0 = arith.constant 0 : i32
    %c0_i32_1 = arith.constant 0 : i32
    return %c0_i32, %c0_i32_0 : i32, i32
  }
  func.func @transform_7(%arg0: i32) -> (i32, i32) {
    %c0_i32 = arith.constant 0 : i32
    %c0_i32_0 = arith.constant 0 : i32
    %c0_i32_1 = arith.constant 0 : i32
    return %c0_i32, %c0_i32_0 : i32, i32
  }
  func.func @transform_8(%arg0: i32) -> (i32, i32) {
    %c0_i32 = arith.constant 0 : i32
    %c0_i32_0 = arith.constant 0 : i32
    %c0_i32_1 = arith.constant 0 : i32
    return %c0_i32, %c0_i32_0 : i32, i32
  }
  func.func @transform_9(%arg0: i32) -> (i32, i32) {
    %c0_i32 = arith.constant 0 : i32
    %c0_i32_0 = arith.constant 0 : i32
    %c0_i32_1 = arith.constant 0 : i32
    return %c0_i32, %c0_i32_0 : i32, i32
  }
  func.func @transform_10(%arg0: i32) -> (i32, i32) {
    %c0_i32 = arith.constant 0 : i32
    %c0_i32_0 = arith.constant 0 : i32
    %c0_i32_1 = arith.constant 0 : i32
    return %c0_i32, %c0_i32_0 : i32, i32
  }
  func.func @transform_11(%arg0: i32) -> (i32, i32) {
    %c0_i32 = arith.constant 0 : i32
    %c0_i32_0 = arith.constant 0 : i32
    %c0_i32_1 = arith.constant 0 : i32
    return %c0_i32, %c0_i32_0 : i32, i32
  }
  func.func @transform_12(%arg0: i32) -> (i32, i32) {
    %c0_i32 = arith.constant 0 : i32
    %c0_i32_0 = arith.constant 0 : i32
    %c0_i32_1 = arith.constant 0 : i32
    return %c0_i32, %c0_i32_0 : i32, i32
  }
  func.func @transform_13(%arg0: i32) -> (i32, i32) {
    %c0_i32 = arith.constant 0 : i32
    %c0_i32_0 = arith.constant 0 : i32
    %c0_i32_1 = arith.constant 0 : i32
    return %c0_i32, %c0_i32_0 : i32, i32
  }
  func.func @transform_14(%arg0: i32) -> (i32, i32) {
    %c0_i32 = arith.constant 0 : i32
    %c0_i32_0 = arith.constant 0 : i32
    return %arg0, %c0_i32 : i32, i32
  }
  func.func @transform_15(%arg0: i32) -> (i32, i32) {
    %c0_i32 = arith.constant 0 : i32
    %c0_i32_0 = arith.constant 0 : i32
    return %arg0, %c0_i32 : i32, i32
  }
  func.func @transform_16(%arg0: i32) -> (i32, i32) {
    %c0_i32 = arith.constant 0 : i32
    %c0_i32_0 = arith.constant 0 : i32
    return %arg0, %c0_i32 : i32, i32
  }
}

</mosaic_0001>

<llo_original>
// kernel: tpu_custom_call.1
$region0: #{tpu_custom_call.1}
  #allocation0 [shape = 'u32[]', space=smem, size = 0x4, offset = 0x4, fixed_abs, tag = 'smem constant byte address 0x4 - core index']
  #allocation1 [shape = 'u32[144,128]{1,0:T(1,128)}', space=vmem, size = 0x12000, scoped, tag = 'internal scratch']
  %s0 = inlined_call_operand.hbm [shape: f32[8,64], index: 0, kind: input, shape index: {}]
  %s1 = inlined_call_operand.hbm [shape: f32[8,16], index: 1, kind: input, shape index: {}]
  %s2 = inlined_call_operand.vmem [shape: bf16[64,128], index: 2, kind: input, shape index: {}]
  %s3 = inlined_call_operand.hbm [shape: f32[1,128], index: 3, kind: input, shape index: {}]
  %s4 = inlined_call_operand.vmem [shape: bf16[128,128], index: 4, kind: input, shape index: {}]
  %s5 = inlined_call_operand.hbm [shape: f32[1,128], index: 5, kind: input, shape index: {}]
  %s6 = inlined_call_operand.hbm [shape: bf16[128,256], index: 6, kind: input, shape index: {}]
  %s7 = inlined_call_operand.vmem [shape: f32[1,256], index: 7, kind: input, shape index: {}]
  %s8 = inlined_call_operand.vmem [shape: bf16[16,128], index: 8, kind: input, shape index: {}]
  %s9 = inlined_call_operand.vmem [shape: f32[1,128], index: 9, kind: input, shape index: {}]
  %s10 = inlined_call_operand.hbm [shape: bf16[128,128], index: 10, kind: input, shape index: {}]
  %s11 = inlined_call_operand.vmem [shape: f32[1,128], index: 11, kind: input, shape index: {}]
  %s12 = inlined_call_operand.vmem [shape: bf16[128,64], index: 12, kind: input, shape index: {}]
  %s13 = inlined_call_operand.vmem [shape: f32[1,64], index: 13, kind: input, shape index: {}]
  %s14 = inlined_call_operand.hbm [shape: f32[8,64], index: 14, kind: output, shape index: {0}]
  %s15 = inlined_call_operand.hbm [shape: f32[8,16], index: 15, kind: output, shape index: {1}]
  %s16 = inlined_call_operand.hbm [shape: f32[8,16], index: 16, kind: output, shape index: {2}]
  %17 = xla_tuple %s14, %s15, %s16
  %s18 = sld [smem:[#allocation0]]
  $region106: #{tpu_custom_call.1} parent=0
    _
  %s20 = ssub.s32 1, %s18
  %s21 = scalar_select 0, %s20, %s18
  $region1: #{tpu_custom_call.1} parent=0
    #allocation2 [shape = 'u8[4096]{0}', space=vmem, size = 0x1000, scoped, tag = 'input window, operand 0, single buffered']
    #allocation3 [shape = 's32[1]{0}', space=sflag, size = 0x4, scoped, tag = 'scoped memory for tpu_custom_call.1']
    #allocation4 [shape = 's32[1]{0}', space=sflag, size = 0x4, scoped, tag = 'scoped memory for tpu_custom_call.1']
    #allocation5 [shape = 'u8[4096]{0}', space=vmem, size = 0x1000, scoped, tag = 'input window, operand 1, single buffered']
    #allocation6 [shape = 's32[1]{0}', space=sflag, size = 0x4, scoped, tag = 'scoped memory for tpu_custom_call.1']
    #allocation7 [shape = 'u8[512]{0}', space=vmem, size = 0x400, scoped, tag = 'input window, operand 3, single buffered']
    #allocation8 [shape = 'u8[512]{0}', space=vmem, size = 0x400, scoped, tag = 'input window, operand 5, single buffered']
    #allocation9 [shape = 's32[1]{0}', space=sflag, size = 0x4, scoped, tag = 'scoped memory for tpu_custom_call.1']
    #allocation10 [shape = 'u8[65536]{0}', space=vmem, size = 0x10000, scoped, tag = 'input window, operand 6, single buffered']
    #allocation11 [shape = 'u8[32768]{0}', space=vmem, size = 0x8000, scoped, tag = 'input window, operand 10, single buffered']
    #allocation12 [shape = 's32[1]{0}', space=sflag, size = 0x4, scoped, tag = 'scoped memory for tpu_custom_call.1']
    #allocation13 [shape = 'u8[4096]{0}', space=vmem, size = 0x1000, scoped, tag = 'output window, operand 0, single buffered']
    #allocation14 [shape = 'u8[4096]{0}', space=vmem, size = 0x1000, scoped, tag = 'output window, operand 1, single buffered']
    #allocation15 [shape = 's32[1]{0}', space=sflag, size = 0x4, scoped, tag = 'scoped memory for tpu_custom_call.1']
    #allocation16 [shape = 'u8[4096]{0}', space=vmem, size = 0x1000, scoped, tag = 'output window, operand 2, single buffered']
    %22 = vsyncpa [#allocation3], 0
    %23 = vsyncpa [#allocation6], 0
    %24 = vsyncpa [#allocation9], 0
    %25 = vsyncpa [#allocation12], 0
    %26 = vsyncpa [#allocation4], 0
    %27 = vsyncpa [#allocation15], 0
    // Predicated region
    $region2: #{tpu_custom_call.1} parent=1 // pred_check
      _
    $region3: #{tpu_custom_call.1} parent=1 // pred_check_branch
      %29 = sbr.rel (0) target = $region5
    $region4: #{tpu_custom_call.1} parent=1 // pred_region
      %s31 = ssub.s32 128, 128
      %32 = vsyncadd [#allocation3], %s31
      %s34 = sshll.u32 [#allocation2], 4
      %s35 = int_to_ptr.vmem [resolvable:$true] %s34
      %37 = dma.hbm_to_vmem [thread:$0]  %s0, 128, %s35, [#allocation3]
    $region5: #{tpu_custom_call.1} parent=1 // pred_fallthru
      _
    // Predicated region
    $region6: #{tpu_custom_call.1} parent=1 // pred_check
      _
    $region7: #{tpu_custom_call.1} parent=1 // pred_check_branch
      %39 = sbr.rel (0) target = $region9
    $region8: #{tpu_custom_call.1} parent=1 // pred_region
      %s41 = ssub.s32 128, 128
      %42 = vsyncadd [#allocation6], %s41
      %s44 = sshll.u32 [#allocation5], 4
      %s45 = int_to_ptr.vmem [resolvable:$true] %s44
      %47 = dma.hbm_to_vmem [thread:$0]  %s1, 128, %s45, [#allocation6]
    $region9: #{tpu_custom_call.1} parent=1 // pred_fallthru
      _
    // Predicated region
    $region10: #{tpu_custom_call.1} parent=1 // pred_check
      _
    $region11: #{tpu_custom_call.1} parent=1 // pred_check_branch
      %49 = sbr.rel (0) target = $region13
    $region12: #{tpu_custom_call.1} parent=1 // pred_region
      _
    $region13: #{tpu_custom_call.1} parent=1 // pred_fallthru
      _
    // Predicated region
    $region14: #{tpu_custom_call.1} parent=1 // pred_check
      _
    $region15: #{tpu_custom_call.1} parent=1 // pred_check_branch
      %51 = sbr.rel (0) target = $region17
    $region16: #{tpu_custom_call.1} parent=1 // pred_region
      %s53 = ssub.s32 16, 16
      %54 = vsyncadd [#allocation6], %s53
      %s56 = sshll.u32 [#allocation7], 4
      %s57 = int_to_ptr.vmem [resolvable:$true] %s56
      %59 = dma.hbm_to_vmem [thread:$0]  %s3, 16, %s57, [#allocation6]
    $region17: #{tpu_custom_call.1} parent=1 // pred_fallthru
      _
    // Predicated region
    $region18: #{tpu_custom_call.1} parent=1 // pred_check
      _
    $region19: #{tpu_custom_call.1} parent=1 // pred_check_branch
      %61 = sbr.rel (0) target = $region21
    $region20: #{tpu_custom_call.1} parent=1 // pred_region
      _
    $region21: #{tpu_custom_call.1} parent=1 // pred_fallthru
      _
    // Predicated region
    $region22: #{tpu_custom_call.1} parent=1 // pred_check
      _
    $region23: #{tpu_custom_call.1} parent=1 // pred_check_branch
      %63 = sbr.rel (0) target = $region25
    $region24: #{tpu_custom_call.1} parent=1 // pred_region
      %s65 = ssub.s32 16, 16
      %66 = vsyncadd [#allocation9], %s65
      %s68 = sshll.u32 [#allocation8], 4
      %s69 = int_to_ptr.vmem [resolvable:$true] %s68
      %71 = dma.hbm_to_vmem [thread:$0]  %s5, 16, %s69, [#allocation9]
    $region25: #{tpu_custom_call.1} parent=1 // pred_fallthru
      _
    // Predicated region
    $region26: #{tpu_custom_call.1} parent=1 // pred_check
      _
    $region27: #{tpu_custom_call.1} parent=1 // pred_check_branch
      %73 = sbr.rel (0) target = $region29
    $region28: #{tpu_custom_call.1} parent=1 // pred_region
      %s75 = ssub.s32 2048, 2048
      %76 = vsyncadd [#allocation9], %s75
      %s77 = sshll.u32 [#allocation10], 4
      %s78 = int_to_ptr.vmem [resolvable:$true] %s77
      %83 = dma.hbm_to_vmem [thread:$0]  %s6, 2048, %s78, [#allocation9], 128, 128, 8
    $region29: #{tpu_custom_call.1} parent=1 // pred_fallthru
      _
    // Predicated region
    $region30: #{tpu_custom_call.1} parent=1 // pred_check
      _
    $region31: #{tpu_custom_call.1} parent=1 // pred_check_branch
      %85 = sbr.rel (0) target = $region33
    $region32: #{tpu_custom_call.1} parent=1 // pred_region
      _
    $region33: #{tpu_custom_call.1} parent=1 // pred_fallthru
      _
    // Predicated region
    $region34: #{tpu_custom_call.1} parent=1 // pred_check
      _
    $region35: #{tpu_custom_call.1} parent=1 // pred_check_branch
      %87 = sbr.rel (0) target = $region37
    $region36: #{tpu_custom_call.1} parent=1 // pred_region
      _
    $region37: #{tpu_custom_call.1} parent=1 // pred_fallthru
      _
    // Predicated region
    $region38: #{tpu_custom_call.1} parent=1 // pred_check
      _
    $region39: #{tpu_custom_call.1} parent=1 // pred_check_branch
      %89 = sbr.rel (0) target = $region41
    $region40: #{tpu_custom_call.1} parent=1 // pred_region
      _
    $region41: #{tpu_custom_call.1} parent=1 // pred_fallthru
      _
    // Predicated region
    $region42: #{tpu_custom_call.1} parent=1 // pred_check
      _
    $region43: #{tpu_custom_call.1} parent=1 // pred_check_branch
      %91 = sbr.rel (0) target = $region45
    $region44: #{tpu_custom_call.1} parent=1 // pred_region
      %s93 = ssub.s32 1024, 1024
      %94 = vsyncadd [#allocation12], %s93
      %s95 = sshll.u32 [#allocation11], 4
      %s96 = int_to_ptr.vmem [resolvable:$true] %s95
      %101 = dma.hbm_to_vmem [thread:$0]  %s10, 1024, %s96, [#allocation12], 64, 64, 4
    $region45: #{tpu_custom_call.1} parent=1 // pred_fallthru
      _
    // Predicated region
    $region46: #{tpu_custom_call.1} parent=1 // pred_check
      _
    $region47: #{tpu_custom_call.1} parent=1 // pred_check_branch
      %103 = sbr.rel (0) target = $region49
    $region48: #{tpu_custom_call.1} parent=1 // pred_region
      _
    $region49: #{tpu_custom_call.1} parent=1 // pred_fallthru
      _
    // Predicated region
    $region50: #{tpu_custom_call.1} parent=1 // pred_check
      _
    $region51: #{tpu_custom_call.1} parent=1 // pred_check_branch
      %105 = sbr.rel (0) target = $region53
    $region52: #{tpu_custom_call.1} parent=1 // pred_region
      _
    $region53: #{tpu_custom_call.1} parent=1 // pred_fallthru
      _
    // Predicated region
    $region54: #{tpu_custom_call.1} parent=1 // pred_check
      _
    $region55: #{tpu_custom_call.1} parent=1 // pred_check_branch
      %107 = sbr.rel (0) target = $region57
    $region56: #{tpu_custom_call.1} parent=1 // pred_region
      _
    $region57: #{tpu_custom_call.1} parent=1 // pred_fallthru
      _
    // Predicated region
    $region58: #{tpu_custom_call.1} parent=1 // pred_check
      _
    $region59: #{tpu_custom_call.1} parent=1 // pred_check_branch
      %109 = sbr.rel (0) target = $region61
    $region60: #{tpu_custom_call.1} parent=1 // pred_region
      %110 = dma.done [#allocation3], 128
    $region61: #{tpu_custom_call.1} parent=1 // pred_fallthru
      _
    // Predicated region
    $region62: #{tpu_custom_call.1} parent=1 // pred_check
      _
    $region63: #{tpu_custom_call.1} parent=1 // pred_check_branch
      %112 = sbr.rel (0) target = $region65
    $region64: #{tpu_custom_call.1} parent=1 // pred_region
      %113 = dma.done [#allocation6], 128
    $region65: #{tpu_custom_call.1} parent=1 // pred_fallthru
      _
    // Predicated region
    $region66: #{tpu_custom_call.1} parent=1 // pred_check
      _
    $region67: #{tpu_custom_call.1} parent=1 // pred_check_branch
      %115 = sbr.rel (0) target = $region69
    $region68: #{tpu_custom_call.1} parent=1 // pred_region
      %116 = dma.done [#allocation6], 16
    $region69: #{tpu_custom_call.1} parent=1 // pred_fallthru
      _
    // Predicated region
    $region70: #{tpu_custom_call.1} parent=1 // pred_check
      _
    $region71: #{tpu_custom_call.1} parent=1 // pred_check_branch
      %118 = sbr.rel (0) target = $region73
    $region72: #{tpu_custom_call.1} parent=1 // pred_region
      %119 = dma.done [#allocation9], 16
    $region73: #{tpu_custom_call.1} parent=1 // pred_fallthru
      _
    // Predicated region
    $region74: #{tpu_custom_call.1} parent=1 // pred_check
      _
    $region75: #{tpu_custom_call.1} parent=1 // pred_check_branch
      %121 = sbr.rel (0) target = $region77
    $region76: #{tpu_custom_call.1} parent=1 // pred_region
      %122 = dma.done [#allocation9], 2048
    $region77: #{tpu_custom_call.1} parent=1 // pred_fallthru
      _
    // Predicated region
    $region78: #{tpu_custom_call.1} parent=1 // pred_check
      _
    $region79: #{tpu_custom_call.1} parent=1 // pred_check_branch
      %124 = sbr.rel (0) target = $region81
    $region80: #{tpu_custom_call.1} parent=1 // pred_region
      %125 = dma.done [#allocation12], 1024
    $region81: #{tpu_custom_call.1} parent=1 // pred_fallthru
      _
    %v127 = vld [vmem:[#allocation2] sm:$0xff]
    %v128 = vpack.c.bf16 %v127, %v127
    %v129 = vld [vmem:[%s2] sm:$0xf]
    %v130 = vld [vmem:[%s2 + $0x4] sm:$0xf]
    %v131 = vld [vmem:[%s2 + $0x8] sm:$0xf]
    %v132 = vld [vmem:[%s2 + $0xc] sm:$0xf]
    %v133 = vld [vmem:[%s2 + $0x10] sm:$0xf]
    %v134 = vld [vmem:[%s2 + $0x14] sm:$0xf]
    %v135 = vld [vmem:[%s2 + $0x18] sm:$0xf]
    %v136 = vld [vmem:[%s2 + $0x1c] sm:$0xf]
    %v137 = vld [vmem:[#allocation7] sm:$0x1]
    %v139 = vlaneseq
    %v140 = vshrl.u32 %v139, 7
    %v141 = vsub.s32 0, %v140
    %v142 = vrot.slane %v137, %v141
    %v152 = vunpack.c.l.b16 %v129
    %v153 = vunpack.c.l.b16 %v130
    %v154 = vunpack.c.l.b16 %v131
    %v155 = vunpack.c.l.b16 %v132
    %v156 = vunpack.c.l.b16 %v133
    %v157 = vunpack.c.l.b16 %v134
    %v158 = vunpack.c.l.b16 %v135
    %v159 = vunpack.c.l.b16 %v136
    %v160 = vpack.c.b16 %v153, %v152
    %v161 = vpack.c.b16 %v155, %v154
    %v162 = vpack.c.b16 %v157, %v156
    %v163 = vpack.c.b16 %v159, %v158
    %vm168 = vcmask 523264
    %v170 = vsel %vm168, %v128, 0
    %172 = vmatprep.subr.bf16.mxu0 0
    %173 = vmatpush1.bf16.msra.mxu0 0
    %174 = vmatprep.subr.bf16.mxu0 0
    %175 = vmatpush1.bf16.msra.mxu0 0
    %176 = vmatprep.subr.bf16.mxu0 0
    %177 = vmatpush1.bf16.msra.mxu0 0
    %178 = vmatprep.subr.bf16.mxu0 0
    %179 = vmatpush1.bf16.msra.mxu0 0
    %180 = vmatprep.subr.bf16.mxu0 0
    %181 = vmatpush1.bf16.msra.mxu0 %v163
    %182 = vmatprep.subr.bf16.mxu0 0
    %183 = vmatpush1.bf16.msra.mxu0 %v162
    %184 = vmatprep.subr.bf16.mxu0 0
    %185 = vmatpush1.bf16.msra.mxu0 %v161
    %186 = vmatprep.subr.bf16.mxu0 0
    %187 = vmatpush1.bf16.msra.mxu0 %v160
    %188 = vmatprep.subr.bf16.mxu0 0
    %189 = vmatpush2.bf16.msra.mxu0 0
    %190 = vmatprep.subr.bf16.mxu0 0
    %191 = vmatpush2.bf16.msra.mxu0 0
    %192 = vmatprep.subr.bf16.mxu0 0
    %193 = vmatpush2.bf16.msra.mxu0 0
    %194 = vmatprep.subr.bf16.mxu0 0
    %195 = vmatpush2.bf16.msra.mxu0 0
    %196 = vmatprep.subr.bf16.mxu0 0
    %197 = vmatpush2.bf16.msra.mxu0 0
    %198 = vmatprep.subr.bf16.mxu0 0
    %199 = vmatpush2.bf16.msra.mxu0 0
    %200 = vmatprep.subr.bf16.mxu0 0
    %201 = vmatpush2.bf16.msra.mxu0 0
    %202 = vmatprep.subr.bf16.mxu0 0
    %203 = vmatpush2.bf16.msra.mxu0 0
    %204 = vmatprep.mubr.bf16.mxu0 0
    %205 = vmatmul.mubr.bf16.gmra.mxu0 %v170
    %v206 = vpop.f32.mrf.mxu0
    %v207 = vadd.f32 %v142, %v206
    %v208 = vpop.f32.mrf.mxu0
    %v209 = vpop.f32.mrf.mxu0
    %v210 = vpop.f32.mrf.mxu0
    %211 = vdwg.mxu0
    %v212 = vmax.f32 %v207, 0.0
    %v213 = vpack.c.bf16 %v212, %v212
    %v214 = vld [vmem:[%s4] sm:$0xf]
    %v215 = vld [vmem:[%s4 + $0x4] sm:$0xf]
    %v216 = vld [vmem:[%s4 + $0x8] sm:$0xf]
    %v217 = vld [vmem:[%s4 + $0xc] sm:$0xf]
    %v218 = vld [vmem:[%s4 + $0x10] sm:$0xf]
    %v219 = vld [vmem:[%s4 + $0x14] sm:$0xf]
    %v220 = vld [vmem:[%s4 + $0x18] sm:$0xf]
    %v221 = vld [vmem:[%s4 + $0x1c] sm:$0xf]
    %v222 = vld [vmem:[%s4 + $0x20] sm:$0xf]
    %v223 = vld [vmem:[%s4 + $0x24] sm:$0xf]
    %v224 = vld [vmem:[%s4 + $0x28] sm:$0xf]
    %v225 = vld [vmem:[%s4 + $0x2c] sm:$0xf]
    %v226 = vld [vmem:[%s4 + $0x30] sm:$0xf]
    %v227 = vld [vmem:[%s4 + $0x34] sm:$0xf]
    %v228 = vld [vmem:[%s4 + $0x38] sm:$0xf]
    %v229 = vld [vmem:[%s4 + $0x3c] sm:$0xf]
    %v230 = vld [vmem:[#allocation8] sm:$0x1]
    %v232 = vlaneseq
    %v233 = vshrl.u32 %v232, 7
    %v234 = vsub.s32 0, %v233
    %v235 = vrot.slane %v230, %v234
    %v253 = vunpack.c.l.b16 %v214
    %v254 = vunpack.c.l.b16 %v215
    %v255 = vunpack.c.l.b16 %v216
    %v256 = vunpack.c.l.b16 %v217
    %v257 = vunpack.c.l.b16 %v218
    %v258 = vunpack.c.l.b16 %v219
    %v259 = vunpack.c.l.b16 %v220
    %v260 = vunpack.c.l.b16 %v221
    %v261 = vunpack.c.l.b16 %v222
    %v262 = vunpack.c.l.b16 %v223
    %v263 = vunpack.c.l.b16 %v224
    %v264 = vunpack.c.l.b16 %v225
    %v265 = vunpack.c.l.b16 %v226
    %v266 = vunpack.c.l.b16 %v227
    %v267 = vunpack.c.l.b16 %v228
    %v268 = vunpack.c.l.b16 %v229
    %v269 = vpack.c.b16 %v254, %v253
    %v270 = vpack.c.b16 %v256, %v255
    %v271 = vpack.c.b16 %v258, %v257
    %v272 = vpack.c.b16 %v260, %v259
    %v273 = vpack.c.b16 %v262, %v261
    %v274 = vpack.c.b16 %v264, %v263
    %v275 = vpack.c.b16 %v266, %v265
    %v276 = vpack.c.b16 %v268, %v267
    %285 = vmatprep.subr.bf16.mxu0 0
    %286 = vmatpush1.bf16.msra.mxu0 %v276
    %287 = vmatprep.subr.bf16.mxu0 0
    %288 = vmatpush1.bf16.msra.mxu0 %v275
    %289 = vmatprep.subr.bf16.mxu0 0
    %290 = vmatpush1.bf16.msra.mxu0 %v274
    %291 = vmatprep.subr.bf16.mxu0 0
    %292 = vmatpush1.bf16.msra.mxu0 %v273
    %293 = vmatprep.subr.bf16.mxu0 0
    %294 = vmatpush1.bf16.msra.mxu0 %v272
    %295 = vmatprep.subr.bf16.mxu0 0
    %296 = vmatpush1.bf16.msra.mxu0 %v271
    %297 = vmatprep.subr.bf16.mxu0 0
    %298 = vmatpush1.bf16.msra.mxu0 %v270
    %299 = vmatprep.subr.bf16.mxu0 0
    %300 = vmatpush1.bf16.msra.mxu0 %v269
    %301 = vmatprep.subr.bf16.mxu0 0
    %302 = vmatpush2.bf16.msra.mxu0 0
    %303 = vmatprep.subr.bf16.mxu0 0
    %304 = vmatpush2.bf16.msra.mxu0 0
    %305 = vmatprep.subr.bf16.mxu0 0
    %306 = vmatpush2.bf16.msra.mxu0 0
    %307 = vmatprep.subr.bf16.mxu0 0
    %308 = vmatpush2.bf16.msra.mxu0 0
    %309 = vmatprep.subr.bf16.mxu0 0
    %310 = vmatpush2.bf16.msra.mxu0 0
    %311 = vmatprep.subr.bf16.mxu0 0
    %312 = vmatpush2.bf16.msra.mxu0 0
    %313 = vmatprep.subr.bf16.mxu0 0
    %314 = vmatpush2.bf16.msra.mxu0 0
    %315 = vmatprep.subr.bf16.mxu0 0
    %316 = vmatpush2.bf16.msra.mxu0 0
    %317 = vmatprep.mubr.bf16.mxu0 0
    %318 = vmatmul.mubr.bf16.gmra.mxu0 %v213
    %v319 = vpop.f32.mrf.mxu0
    %v320 = vadd.f32 %v235, %v319
    %v321 = vpop.f32.mrf.mxu0
    %v322 = vpop.f32.mrf.mxu0
    %v323 = vpop.f32.mrf.mxu0
    %324 = vdwg.mxu0
    %v325 = vmax.f32 %v320, 0.0
    %v326 = vpack.c.bf16 %v325, %v325
    %v327 = vld [vmem:[#allocation10] sm:$0xff]
    %v328 = vld [vmem:[#allocation10 + $0x8] sm:$0xff]
    %v329 = vld [vmem:[#allocation10 + $0x10] sm:$0xff]
    %v330 = vld [vmem:[#allocation10 + $0x18] sm:$0xff]
    %v331 = vld [vmem:[#allocation10 + $0x20] sm:$0xff]
    %v332 = vld [vmem:[#allocation10 + $0x28] sm:$0xff]
    %v333 = vld [vmem:[#allocation10 + $0x30] sm:$0xff]
    %v334 = vld [vmem:[#allocation10 + $0x38] sm:$0xff]
    %v335 = vld [vmem:[#allocation10 + $0x40] sm:$0xff]
    %v336 = vld [vmem:[#allocation10 + $0x48] sm:$0xff]
    %v337 = vld [vmem:[#allocation10 + $0x50] sm:$0xff]
    %v338 = vld [vmem:[#allocation10 + $0x58] sm:$0xff]
    %v339 = vld [vmem:[#allocation10 + $0x60] sm:$0xff]
    %v340 = vld [vmem:[#allocation10 + $0x68] sm:$0xff]
    %v341 = vld [vmem:[#allocation10 + $0x70] sm:$0xff]
    %v342 = vld [vmem:[#allocation10 + $0x78] sm:$0xff]
    %v343 = vld [vmem:[%s7] sm:$0x3]
    %v345 = vlaneseq
    %v346 = vshrl.u32 %v345, 7
    %v347 = vsub.s32 0, %v346
    %v348 = vrot.slane %v343, %v347
    %v349 = vlaneseq
    %v350 = vshrl.u32 %v349, 7
    %v351 = vsub.s32 1, %v350
    %v352 = vrot.slane %v343, %v351
    %v371 = vunpack.c.l.b16 %v327
    %v372 = vunpack.c.h.b16 %v327
    %v373 = vunpack.c.l.b16 %v328
    %v374 = vunpack.c.h.b16 %v328
    %v375 = vunpack.c.l.b16 %v329
    %v376 = vunpack.c.h.b16 %v329
    %v377 = vunpack.c.l.b16 %v330
    %v378 = vunpack.c.h.b16 %v330
    %v379 = vunpack.c.l.b16 %v331
    %v380 = vunpack.c.h.b16 %v331
    %v381 = vunpack.c.l.b16 %v332
    %v382 = vunpack.c.h.b16 %v332
    %v383 = vunpack.c.l.b16 %v333
    %v384 = vunpack.c.h.b16 %v333
    %v385 = vunpack.c.l.b16 %v334
    %v386 = vunpack.c.h.b16 %v334
    %v387 = vunpack.c.l.b16 %v335
    %v388 = vunpack.c.h.b16 %v335
    %v389 = vunpack.c.l.b16 %v336
    %v390 = vunpack.c.h.b16 %v336
    %v391 = vunpack.c.l.b16 %v337
    %v392 = vunpack.c.h.b16 %v337
    %v393 = vunpack.c.l.b16 %v338
    %v394 = vunpack.c.h.b16 %v338
    %v395 = vunpack.c.l.b16 %v339
    %v396 = vunpack.c.h.b16 %v339
    %v397 = vunpack.c.l.b16 %v340
    %v398 = vunpack.c.h.b16 %v340
    %v399 = vunpack.c.l.b16 %v341
    %v400 = vunpack.c.h.b16 %v341
    %v401 = vunpack.c.l.b16 %v342
    %v402 = vunpack.c.h.b16 %v342
    %v403 = vpack.c.b16 %v373, %v371
    %v404 = vpack.c.b16 %v374, %v372
    %v405 = vpack.c.b16 %v377, %v375
    %v406 = vpack.c.b16 %v378, %v376
    %v407 = vpack.c.b16 %v381, %v379
    %v408 = vpack.c.b16 %v382, %v380
    %v409 = vpack.c.b16 %v385, %v383
    %v410 = vpack.c.b16 %v386, %v384
    %v411 = vpack.c.b16 %v389, %v387
    %v412 = vpack.c.b16 %v390, %v388
    %v413 = vpack.c.b16 %v393, %v391
    %v414 = vpack.c.b16 %v394, %v392
    %v415 = vpack.c.b16 %v397, %v395
    %v416 = vpack.c.b16 %v398, %v396
    %v417 = vpack.c.b16 %v401, %v399
    %v418 = vpack.c.b16 %v402, %v400
    %435 = vmatprep.subr.bf16.mxu0 %v418
    %436 = vmatpush1.bf16.msra.mxu0 %v417
    %437 = vmatprep.subr.bf16.mxu0 %v416
    %438 = vmatpush1.bf16.msra.mxu0 %v415
    %439 = vmatprep.subr.bf16.mxu0 %v414
    %440 = vmatpush1.bf16.msra.mxu0 %v413
    %441 = vmatprep.subr.bf16.mxu0 %v412
    %442 = vmatpush1.bf16.msra.mxu0 %v411
    %443 = vmatprep.subr.bf16.mxu0 %v410
    %444 = vmatpush1.bf16.msra.mxu0 %v409
    %445 = vmatprep.subr.bf16.mxu0 %v408
    %446 = vmatpush1.bf16.msra.mxu0 %v407
    %447 = vmatprep.subr.bf16.mxu0 %v406
    %448 = vmatpush1.bf16.msra.mxu0 %v405
    %449 = vmatprep.subr.bf16.mxu0 %v404
    %450 = vmatpush1.bf16.msra.mxu0 %v403
    %451 = vmatprep.subr.bf16.mxu0 0
    %452 = vmatpush2.bf16.msra.mxu0 0
    %453 = vmatprep.subr.bf16.mxu0 0
    %454 = vmatpush2.bf16.msra.mxu0 0
    %455 = vmatprep.subr.bf16.mxu0 0
    %456 = vmatpush2.bf16.msra.mxu0 0
    %457 = vmatprep.subr.bf16.mxu0 0
    %458 = vmatpush2.bf16.msra.mxu0 0
    %459 = vmatprep.subr.bf16.mxu0 0
    %460 = vmatpush2.bf16.msra.mxu0 0
    %461 = vmatprep.subr.bf16.mxu0 0
    %462 = vmatpush2.bf16.msra.mxu0 0
    %463 = vmatprep.subr.bf16.mxu0 0
    %464 = vmatpush2.bf16.msra.mxu0 0
    %465 = vmatprep.subr.bf16.mxu0 0
    %466 = vmatpush2.bf16.msra.mxu0 0
    %467 = vmatprep.mubr.bf16.mxu0 0
    %468 = vmatmul.mubr.bf16.gmra.mxu0 %v326
    %v469 = vpop.f32.mrf.mxu0
    %v470 = vadd.f32 %v348, %v469
    %v471 = vpop.f32.mrf.mxu0
    %v472 = vadd.f32 %v352, %v471
    %v473 = vpop.f32.mrf.mxu0
    %v474 = vpop.f32.mrf.mxu0
    %475 = vdwg.mxu0
    %vm476 = vcmask 130048
    %477 = vst.msk [vmem:[#allocation14] sm:$0xff] %vm476, %v470
    %478 = vst.msk [vmem:[#allocation16] sm:$0xff] %vm476, %v472
    %v479 = vmul.f32 %v472, 0.5
    %v480 = vmul.f32 %v479, 1.442695
    %v481 = vpow.pop %v480
    %v482 = vld [vmem:[#allocation5] sm:$0xff]
    %v483 = vmul.f32 %v482, %v481
    %v484 = vadd.f32 %v470, %v483
    %v485 = vpack.c.bf16 %v484, %v484
    %v486 = vld [vmem:[%s8] sm:$0xf]
    %v487 = vld [vmem:[%s8 + $0x4] sm:$0xf]
    %v488 = vld [vmem:[%s9] sm:$0x1]
    %v490 = vlaneseq
    %v491 = vshrl.u32 %v490, 7
    %v492 = vsub.s32 0, %v491
    %v493 = vrot.slane %v488, %v492
    %v497 = vunpack.c.l.b16 %v486
    %v498 = vunpack.c.l.b16 %v487
    %v499 = vpack.c.b16 %v498, %v497
    %v502 = vsel %vm476, %v485, 0
    %504 = vmatprep.subr.bf16.mxu0 0
    %505 = vmatpush1.bf16.msra.mxu0 0
    %506 = vmatprep.subr.bf16.mxu0 0
    %507 = vmatpush1.bf16.msra.mxu0 0
    %508 = vmatprep.subr.bf16.mxu0 0
    %509 = vmatpush1.bf16.msra.mxu0 0
    %510 = vmatprep.subr.bf16.mxu0 0
    %511 = vmatpush1.bf16.msra.mxu0 0
    %512 = vmatprep.subr.bf16.mxu0 0
    %513 = vmatpush1.bf16.msra.mxu0 0
    %514 = vmatprep.subr.bf16.mxu0 0
    %515 = vmatpush1.bf16.msra.mxu0 0
    %516 = vmatprep.subr.bf16.mxu0 0
    %517 = vmatpush1.bf16.msra.mxu0 0
    %518 = vmatprep.subr.bf16.mxu0 0
    %519 = vmatpush1.bf16.msra.mxu0 %v499
    %520 = vmatprep.subr.bf16.mxu0 0
    %521 = vmatpush2.bf16.msra.mxu0 0
    %522 = vmatprep.subr.bf16.mxu0 0
    %523 = vmatpush2.bf16.msra.mxu0 0
    %524 = vmatprep.subr.bf16.mxu0 0
    %525 = vmatpush2.bf16.msra.mxu0 0
    %526 = vmatprep.subr.bf16.mxu0 0
    %527 = vmatpush2.bf16.msra.mxu0 0
    %528 = vmatprep.subr.bf16.mxu0 0
    %529 = vmatpush2.bf16.msra.mxu0 0
    %530 = vmatprep.subr.bf16.mxu0 0
    %531 = vmatpush2.bf16.msra.mxu0 0
    %532 = vmatprep.subr.bf16.mxu0 0
    %533 = vmatpush2.bf16.msra.mxu0 0
    %534 = vmatprep.subr.bf16.mxu0 0
    %535 = vmatpush2.bf16.msra.mxu0 0
    %536 = vmatprep.mubr.bf16.mxu0 0
    %537 = vmatmul.mubr.bf16.gmra.mxu0 %v502
    %v538 = vpop.f32.mrf.mxu0
    %v539 = vadd.f32 %v493, %v538
    %v540 = vpop.f32.mrf.mxu0
    %v541 = vpop.f32.mrf.mxu0
    %v542 = vpop.f32.mrf.mxu0
    %543 = vdwg.mxu0
    %v544 = vmax.f32 %v539, 0.0
    %v545 = vpack.c.bf16 %v544, %v544
    %v546 = vld [vmem:[#allocation11] sm:$0xf]
    %v547 = vld [vmem:[#allocation11 + $0x4] sm:$0xf]
    %v548 = vld [vmem:[#allocation11 + $0x8] sm:$0xf]
    %v549 = vld [vmem:[#allocation11 + $0xc] sm:$0xf]
    %v550 = vld [vmem:[#allocation11 + $0x10] sm:$0xf]
    %v551 = vld [vmem:[#allocation11 + $0x14] sm:$0xf]
    %v552 = vld [vmem:[#allocation11 + $0x18] sm:$0xf]
    %v553 = vld [vmem:[#allocation11 + $0x1c] sm:$0xf]
    %v554 = vld [vmem:[#allocation11 + $0x20] sm:$0xf]
    %v555 = vld [vmem:[#allocation11 + $0x24] sm:$0xf]
    %v556 = vld [vmem:[#allocation11 + $0x28] sm:$0xf]
    %v557 = vld [vmem:[#allocation11 + $0x2c] sm:$0xf]
    %v558 = vld [vmem:[#allocation11 + $0x30] sm:$0xf]
    %v559 = vld [vmem:[#allocation11 + $0x34] sm:$0xf]
    %v560 = vld [vmem:[#allocation11 + $0x38] sm:$0xf]
    %v561 = vld [vmem:[#allocation11 + $0x3c] sm:$0xf]
    %v562 = vld [vmem:[%s11] sm:$0x1]
    %v564 = vlaneseq
    %v565 = vshrl.u32 %v564, 7
    %v566 = vsub.s32 0, %v565
    %v567 = vrot.slane %v562, %v566
    %v585 = vunpack.c.l.b16 %v546
    %v586 = vunpack.c.l.b16 %v547
    %v587 = vunpack.c.l.b16 %v548
    %v588 = vunpack.c.l.b16 %v549
    %v589 = vunpack.c.l.b16 %v550
    %v590 = vunpack.c.l.b16 %v551
    %v591 = vunpack.c.l.b16 %v552
    %v592 = vunpack.c.l.b16 %v553
    %v593 = vunpack.c.l.b16 %v554
    %v594 = vunpack.c.l.b16 %v555
    %v595 = vunpack.c.l.b16 %v556
    %v596 = vunpack.c.l.b16 %v557
    %v597 = vunpack.c.l.b16 %v558
    %v598 = vunpack.c.l.b16 %v559
    %v599 = vunpack.c.l.b16 %v560
    %v600 = vunpack.c.l.b16 %v561
    %v601 = vpack.c.b16 %v586, %v585
    %v602 = vpack.c.b16 %v588, %v587
    %v603 = vpack.c.b16 %v590, %v589
    %v604 = vpack.c.b16 %v592, %v591
    %v605 = vpack.c.b16 %v594, %v593
    %v606 = vpack.c.b16 %v596, %v595
    %v607 = vpack.c.b16 %v598, %v597
    %v608 = vpack.c.b16 %v600, %v599
    %617 = vmatprep.subr.bf16.mxu0 0
    %618 = vmatpush1.bf16.msra.mxu0 %v608
    %619 = vmatprep.subr.bf16.mxu0 0
    %620 = vmatpush1.bf16.msra.mxu0 %v607
    %621 = vmatprep.subr.bf16.mxu0 0
    %622 = vmatpush1.bf16.msra.mxu0 %v606
    %623 = vmatprep.subr.bf16.mxu0 0
    %624 = vmatpush1.bf16.msra.mxu0 %v605
    %625 = vmatprep.subr.bf16.mxu0 0
    %626 = vmatpush1.bf16.msra.mxu0 %v604
    %627 = vmatprep.subr.bf16.mxu0 0
    %628 = vmatpush1.bf16.msra.mxu0 %v603
    %629 = vmatprep.subr.bf16.mxu0 0
    %630 = vmatpush1.bf16.msra.mxu0 %v602
    %631 = vmatprep.subr.bf16.mxu0 0
    %632 = vmatpush1.bf16.msra.mxu0 %v601
    %633 = vmatprep.subr.bf16.mxu0 0
    %634 = vmatpush2.bf16.msra.mxu0 0
    %635 = vmatprep.subr.bf16.mxu0 0
    %636 = vmatpush2.bf16.msra.mxu0 0
    %637 = vmatprep.subr.bf16.mxu0 0
    %638 = vmatpush2.bf16.msra.mxu0 0
    %639 = vmatprep.subr.bf16.mxu0 0
    %640 = vmatpush2.bf16.msra.mxu0 0
    %641 = vmatprep.subr.bf16.mxu0 0
    %642 = vmatpush2.bf16.msra.mxu0 0
    %643 = vmatprep.subr.bf16.mxu0 0
    %644 = vmatpush2.bf16.msra.mxu0 0
    %645 = vmatprep.subr.bf16.mxu0 0
    %646 = vmatpush2.bf16.msra.mxu0 0
    %647 = vmatprep.subr.bf16.mxu0 0
    %648 = vmatpush2.bf16.msra.mxu0 0
    %649 = vmatprep.mubr.bf16.mxu0 0
    %650 = vmatmul.mubr.bf16.gmra.mxu0 %v545
    %v651 = vpop.f32.mrf.mxu0
    %v652 = vadd.f32 %v567, %v651
    %v653 = vpop.f32.mrf.mxu0
    %v654 = vpop.f32.mrf.mxu0
    %v655 = vpop.f32.mrf.mxu0
    %656 = vdwg.mxu0
    %v657 = vmax.f32 %v652, 0.0
    %v658 = vpack.c.bf16 %v657, %v657
    %v659 = vld [vmem:[%s12] sm:$0xf]
    %v660 = vld [vmem:[%s12 + $0x4] sm:$0xf]
    %v661 = vld [vmem:[%s12 + $0x8] sm:$0xf]
    %v662 = vld [vmem:[%s12 + $0xc] sm:$0xf]
    %v663 = vld [vmem:[%s12 + $0x10] sm:$0xf]
    %v664 = vld [vmem:[%s12 + $0x14] sm:$0xf]
    %v665 = vld [vmem:[%s12 + $0x18] sm:$0xf]
    %v666 = vld [vmem:[%s12 + $0x1c] sm:$0xf]
    %v667 = vld [vmem:[%s12 + $0x20] sm:$0xf]
    %v668 = vld [vmem:[%s12 + $0x24] sm:$0xf]
    %v669 = vld [vmem:[%s12 + $0x28] sm:$0xf]
    %v670 = vld [vmem:[%s12 + $0x2c] sm:$0xf]
    %v671 = vld [vmem:[%s12 + $0x30] sm:$0xf]
    %v672 = vld [vmem:[%s12 + $0x34] sm:$0xf]
    %v673 = vld [vmem:[%s12 + $0x38] sm:$0xf]
    %v674 = vld [vmem:[%s12 + $0x3c] sm:$0xf]
    %v675 = vld [vmem:[%s13] sm:$0x1]
    %v677 = vlaneseq
    %v678 = vshrl.u32 %v677, 7
    %v679 = vsub.s32 0, %v678
    %v680 = vrot.slane %v675, %v679
    %v698 = vunpack.c.l.b16 %v659
    %v699 = vunpack.c.l.b16 %v660
    %v700 = vunpack.c.l.b16 %v661
    %v701 = vunpack.c.l.b16 %v662
    %v702 = vunpack.c.l.b16 %v663
    %v703 = vunpack.c.l.b16 %v664
    %v704 = vunpack.c.l.b16 %v665
    %v705 = vunpack.c.l.b16 %v666
    %v706 = vunpack.c.l.b16 %v667
    %v707 = vunpack.c.l.b16 %v668
    %v708 = vunpack.c.l.b16 %v669
    %v709 = vunpack.c.l.b16 %v670
    %v710 = vunpack.c.l.b16 %v671
    %v711 = vunpack.c.l.b16 %v672
    %v712 = vunpack.c.l.b16 %v673
    %v713 = vunpack.c.l.b16 %v674
    %v714 = vpack.c.b16 %v699, %v698
    %v715 = vpack.c.b16 %v701, %v700
    %v716 = vpack.c.b16 %v703, %v702
    %v717 = vpack.c.b16 %v705, %v704
    %v718 = vpack.c.b16 %v707, %v706
    %v719 = vpack.c.b16 %v709, %v708
    %v720 = vpack.c.b16 %v711, %v710
    %v721 = vpack.c.b16 %v713, %v712
    %730 = vmatprep.subr.bf16.mxu0 0
    %731 = vmatpush1.bf16.msra.mxu0 %v721
    %732 = vmatprep.subr.bf16.mxu0 0
    %733 = vmatpush1.bf16.msra.mxu0 %v720
    %734 = vmatprep.subr.bf16.mxu0 0
    %735 = vmatpush1.bf16.msra.mxu0 %v719
    %736 = vmatprep.subr.bf16.mxu0 0
    %737 = vmatpush1.bf16.msra.mxu0 %v718
    %738 = vmatprep.subr.bf16.mxu0 0
    %739 = vmatpush1.bf16.msra.mxu0 %v717
    %740 = vmatprep.subr.bf16.mxu0 0
    %741 = vmatpush1.bf16.msra.mxu0 %v716
    %742 = vmatprep.subr.bf16.mxu0 0
    %743 = vmatpush1.bf16.msra.mxu0 %v715
    %744 = vmatprep.subr.bf16.mxu0 0
    %745 = vmatpush1.bf16.msra.mxu0 %v714
    %746 = vmatprep.subr.bf16.mxu0 0
    %747 = vmatpush2.bf16.msra.mxu0 0
    %748 = vmatprep.subr.bf16.mxu0 0
    %749 = vmatpush2.bf16.msra.mxu0 0
    %750 = vmatprep.subr.bf16.mxu0 0
    %751 = vmatpush2.bf16.msra.mxu0 0
    %752 = vmatprep.subr.bf16.mxu0 0
    %753 = vmatpush2.bf16.msra.mxu0 0
    %754 = vmatprep.subr.bf16.mxu0 0
    %755 = vmatpush2.bf16.msra.mxu0 0
    %756 = vmatprep.subr.bf16.mxu0 0
    %757 = vmatpush2.bf16.msra.mxu0 0
    %758 = vmatprep.subr.bf16.mxu0 0
    %759 = vmatpush2.bf16.msra.mxu0 0
    %760 = vmatprep.subr.bf16.mxu0 0
    %761 = vmatpush2.bf16.msra.mxu0 0
    %762 = vmatprep.mubr.bf16.mxu0 0
    %763 = vmatmul.mubr.bf16.gmra.mxu0 %v658
    %v764 = vpop.f32.mrf.mxu0
    %v765 = vadd.f32 %v680, %v764
    %v766 = vpop.f32.mrf.mxu0
    %v767 = vpop.f32.mrf.mxu0
    %v768 = vpop.f32.mrf.mxu0
    %769 = vdwg.mxu0
    %v770 = vsub.f32 0.0, %v765
    %v771 = vmul.f32 %v770, 1.442695
    %v772 = vpow.pop %v771
    %v773 = vadd.f32 %v772, 1.0
    %v774 = vrcp.pop %v773
    %775 = vst.msk [vmem:[#allocation13] sm:$0xff] %vm168, %v774
    // Predicated region
    $region82: #{tpu_custom_call.1} parent=1 // pred_check
      _
    $region83: #{tpu_custom_call.1} parent=1 // pred_check_branch
      %777 = sbr.rel (0) target = $region85
    $region84: #{tpu_custom_call.1} parent=1 // pred_region
      %s779 = ssub.s32 128, 128
      %780 = vsyncadd [#allocation4], %s779
      %s782 = sshll.u32 [#allocation13], 4
      %s783 = int_to_ptr.vmem [resolvable:$true] %s782
      %785 = dma.vmem_to_hbm [thread:$0]  %s783, 128, %s14, [#allocation4]
    $region85: #{tpu_custom_call.1} parent=1 // pred_fallthru
      _
    // Predicated region
    $region86: #{tpu_custom_call.1} parent=1 // pred_check
      _
    $region87: #{tpu_custom_call.1} parent=1 // pred_check_branch
      %787 = sbr.rel (0) target = $region89
    $region88: #{tpu_custom_call.1} parent=1 // pred_region
      %s789 = ssub.s32 128, 128
      %790 = vsyncadd [#allocation15], %s789
      %s792 = sshll.u32 [#allocation14], 4
      %s793 = int_to_ptr.vmem [resolvable:$true] %s792
      %795 = dma.vmem_to_hbm [thread:$0]  %s793, 128, %s15, [#allocation15]
    $region89: #{tpu_custom_call.1} parent=1 // pred_fallthru
      _
    // Predicated region
    $region90: #{tpu_custom_call.1} parent=1 // pred_check
      _
    $region91: #{tpu_custom_call.1} parent=1 // pred_check_branch
      %797 = sbr.rel (0) target = $region93
    $region92: #{tpu_custom_call.1} parent=1 // pred_region
      %s799 = ssub.s32 128, 128
      %800 = vsyncadd [#allocation15], %s799
      %s802 = sshll.u32 [#allocation16], 4
      %s803 = int_to_ptr.vmem [resolvable:$true] %s802
      %805 = dma.vmem_to_hbm [thread:$0]  %s803, 128, %s16, [#allocation15]
    $region93: #{tpu_custom_call.1} parent=1 // pred_fallthru
      _
    // Predicated region
    $region94: #{tpu_custom_call.1} parent=1 // pred_check
      _
    $region95: #{tpu_custom_call.1} parent=1 // pred_check_branch
      %807 = sbr.rel (0) target = $region97
    $region96: #{tpu_custom_call.1} parent=1 // pred_region
      %808 = dma.done [#allocation4], 128
    $region97: #{tpu_custom_call.1} parent=1 // pred_fallthru
      _
    // Predicated region
    $region98: #{tpu_custom_call.1} parent=1 // pred_check
      _
    $region99: #{tpu_custom_call.1} parent=1 // pred_check_branch
      %810 = sbr.rel (0) target = $region101
    $region100: #{tpu_custom_call.1} parent=1 // pred_region
      %811 = dma.done [#allocation15], 128
    $region101: #{tpu_custom_call.1} parent=1 // pred_fallthru
      _
    // Predicated region
    $region102: #{tpu_custom_call.1} parent=1 // pred_check
      _
    $region103: #{tpu_custom_call.1} parent=1 // pred_check_branch
      %813 = sbr.rel (0) target = $region105
    $region104: #{tpu_custom_call.1} parent=1 // pred_region
      %814 = dma.done [#allocation15], 128
    $region105: #{tpu_custom_call.1} parent=1 // pred_fallthru
      _
    %815 = vsyncpa [#allocation3], 1
    %816 = vsyncpa [#allocation6], 1
    %817 = vsyncpa [#allocation9], 1
    %818 = vsyncpa [#allocation12], 1
    %819 = vsyncpa [#allocation4], 1
    %820 = vsyncpa [#allocation15], 1

// kernel: tpu_custom_call.1
$region0: #{tpu_custom_call.1}
  #allocation0 [shape = 'u32[]', space=smem, size = 0x4, offset = 0x4, fixed_abs, tag = 'smem constant byte address 0x4 - core index']
  #allocation1 [shape = 'u32[144,128]{1,0:T(1,128)}', space=vmem, size = 0x12000, scoped, tag = 'internal scratch']
  %s0 = inlined_call_operand.hbm [shape: f32[8,64], index: 0, kind: input, shape index: {}]
  %s1 = inlined_call_operand.hbm [shape: f32[8,16], index: 1, kind: input, shape index: {}]
  %s2 = inlined_call_operand.vmem [shape: bf16[64,128], index: 2, kind: input, shape index: {}]
  %s3 = inlined_call_operand.hbm [shape: f32[1,128], index: 3, kind: input, shape index: {}]
  %s4 = inlined_call_operand.vmem [shape: bf16[128,128], index: 4, kind: input, shape index: {}]
  %s5 = inlined_call_operand.hbm [shape: f32[1,128], index: 5, kind: input, shape index: {}]
  %s6 = inlined_call_operand.hbm [shape: bf16[128,256], index: 6, kind: input, shape index: {}]
  %s7 = inlined_call_operand.vmem [shape: f32[1,256], index: 7, kind: input, shape index: {}]
  %s8 = inlined_call_operand.vmem [shape: bf16[16,128], index: 8, kind: input, shape index: {}]
  %s9 = inlined_call_operand.vmem [shape: f32[1,128], index: 9, kind: input, shape index: {}]
  %s10 = inlined_call_operand.hbm [shape: bf16[128,128], index: 10, kind: input, shape index: {}]
  %s11 = inlined_call_operand.vmem [shape: f32[1,128], index: 11, kind: input, shape index: {}]
  %s12 = inlined_call_operand.vmem [shape: bf16[128,64], index: 12, kind: input, shape index: {}]
  %s13 = inlined_call_operand.vmem [shape: f32[1,64], index: 13, kind: input, shape index: {}]
  %s14 = inlined_call_operand.hbm [shape: f32[8,64], index: 14, kind: output, shape index: {0}]
  %s15 = inlined_call_operand.hbm [shape: f32[8,16], index: 15, kind: output, shape index: {1}]
  %s16 = inlined_call_operand.hbm [shape: f32[8,16], index: 16, kind: output, shape index: {2}]
  %17 = xla_tuple %s14, %s15, %s16
  %s18 = sld [smem:[#allocation0]]
  $region106: #{tpu_custom_call.1} parent=0
    _
  %s20 = ssub.s32 1, %s18
  %s21 = scalar_select 0, %s20, %s18
  $region1: #{tpu_custom_call.1} parent=0
    #allocation2 [shape = 'u8[4096]{0}', space=vmem, size = 0x1000, scoped, tag = 'input window, operand 0, single buffered']
    #allocation3 [shape = 's32[1]{0}', space=sflag, size = 0x4, scoped, tag = 'scoped memory for tpu_custom_call.1']
    #allocation4 [shape = 's32[1]{0}', space=sflag, size = 0x4, scoped, tag = 'scoped memory for tpu_custom_call.1']
    #allocation5 [shape = 'u8[4096]{0}', space=vmem, size = 0x1000, scoped, tag = 'input window, operand 1, single buffered']
    #allocation6 [shape = 's32[1]{0}', space=sflag, size = 0x4, scoped, tag = 'scoped memory for tpu_custom_call.1']
    #allocation7 [shape = 'u8[512]{0}', space=vmem, size = 0x400, scoped, tag = 'input window, operand 3, single buffered']
    #allocation8 [shape = 'u8[512]{0}', space=vmem, size = 0x400, scoped, tag = 'input window, operand 5, single buffered']
    #allocation9 [shape = 's32[1]{0}', space=sflag, size = 0x4, scoped, tag = 'scoped memory for tpu_custom_call.1']
    #allocation10 [shape = 'u8[65536]{0}', space=vmem, size = 0x10000, scoped, tag = 'input window, operand 6, single buffered']
    #allocation11 [shape = 'u8[32768]{0}', space=vmem, size = 0x8000, scoped, tag = 'input window, operand 10, single buffered']
    #allocation12 [shape = 's32[1]{0}', space=sflag, size = 0x4, scoped, tag = 'scoped memory for tpu_custom_call.1']
    #allocation13 [shape = 'u8[4096]{0}', space=vmem, size = 0x1000, scoped, tag = 'output window, operand 0, single buffered']
    #allocation14 [shape = 'u8[4096]{0}', space=vmem, size = 0x1000, scoped, tag = 'output window, operand 1, single buffered']
    #allocation15 [shape = 's32[1]{0}', space=sflag, size = 0x4, scoped, tag = 'scoped memory for tpu_custom_call.1']
    #allocation16 [shape = 'u8[4096]{0}', space=vmem, size = 0x1000, scoped, tag = 'output window, operand 2, single buffered']
    %22 = vsyncpa [#allocation3], 0
    %23 = vsyncpa [#allocation6], 0
    %24 = vsyncpa [#allocation9], 0
    %25 = vsyncpa [#allocation12], 0
    %26 = vsyncpa [#allocation4], 0
    %27 = vsyncpa [#allocation15], 0
    // Predicated region
    $region2: #{tpu_custom_call.1} parent=1 // pred_check
      _
    $region3: #{tpu_custom_call.1} parent=1 // pred_check_branch
      %29 = sbr.rel (0) target = $region5
    $region4: #{tpu_custom_call.1} parent=1 // pred_region
      %s31 = ssub.s32 128, 128
      %32 = vsyncadd [#allocation3], %s31
      %s34 = sshll.u32 [#allocation2], 4
      %s35 = int_to_ptr.vmem [resolvable:$true] %s34
      %37 = dma.hbm_to_vmem [thread:$0]  %s0, 128, %s35, [#allocation3]
    $region5: #{tpu_custom_call.1} parent=1 // pred_fallthru
      _
    // Predicated region
    $region6: #{tpu_custom_call.1} parent=1 // pred_check
      _
    $region7: #{tpu_custom_call.1} parent=1 // pred_check_branch
      %39 = sbr.rel (0) target = $region9
    $region8: #{tpu_custom_call.1} parent=1 // pred_region
      %s41 = ssub.s32 128, 128
      %42 = vsyncadd [#allocation6], %s41
      %s44 = sshll.u32 [#allocation5], 4
      %s45 = int_to_ptr.vmem [resolvable:$true] %s44
      %47 = dma.hbm_to_vmem [thread:$0]  %s1, 128, %s45, [#allocation6]
    $region9: #{tpu_custom_call.1} parent=1 // pred_fallthru
      _
    // Predicated region
    $region10: #{tpu_custom_call.1} parent=1 // pred_check
      _
    $region11: #{tpu_custom_call.1} parent=1 // pred_check_branch
      %49 = sbr.rel (0) target = $region13
    $region12: #{tpu_custom_call.1} parent=1 // pred_region
      _
    $region13: #{tpu_custom_call.1} parent=1 // pred_fallthru
      _
    // Predicated region
    $region14: #{tpu_custom_call.1} parent=1 // pred_check
      _
    $region15: #{tpu_custom_call.1} parent=1 // pred_check_branch
      %51 = sbr.rel (0) target = $region17
    $region16: #{tpu_custom_call.1} parent=1 // pred_region
      %s53 = ssub.s32 16, 16
      %54 = vsyncadd [#allocation6], %s53
      %s56 = sshll.u32 [#allocation7], 4
      %s57 = int_to_ptr.vmem [resolvable:$true] %s56
      %59 = dma.hbm_to_vmem [thread:$0]  %s3, 16, %s57, [#allocation6]
    $region17: #{tpu_custom_call.1} parent=1 // pred_fallthru
      _
    // Predicated region
    $region18: #{tpu_custom_call.1} parent=1 // pred_check
      _
    $region19: #{tpu_custom_call.1} parent=1 // pred_check_branch
      %61 = sbr.rel (0) target = $region21
    $region20: #{tpu_custom_call.1} parent=1 // pred_region
      _
    $region21: #{tpu_custom_call.1} parent=1 // pred_fallthru
      _
    // Predicated region
    $region22: #{tpu_custom_call.1} parent=1 // pred_check
      _
    $region23: #{tpu_custom_call.1} parent=1 // pred_check_branch
      %63 = sbr.rel (0) target = $region25
    $region24: #{tpu_custom_call.1} parent=1 // pred_region
      %s65 = ssub.s32 16, 16
      %66 = vsyncadd [#allocation9], %s65
      %s68 = sshll.u32 [#allocation8], 4
      %s69 = int_to_ptr.vmem [resolvable:$true] %s68
      %71 = dma.hbm_to_vmem [thread:$0]  %s5, 16, %s69, [#allocation9]
    $region25: #{tpu_custom_call.1} parent=1 // pred_fallthru
      _
    // Predicated region
    $region26: #{tpu_custom_call.1} parent=1 // pred_check
      _
    $region27: #{tpu_custom_call.1} parent=1 // pred_check_branch
      %73 = sbr.rel (0) target = $region29
    $region28: #{tpu_custom_call.1} parent=1 // pred_region
      %s75 = ssub.s32 2048, 2048
      %76 = vsyncadd [#allocation9], %s75
      %s77 = sshll.u32 [#allocation10], 4
      %s78 = int_to_ptr.vmem [resolvable:$true] %s77
      %83 = dma.hbm_to_vmem [thread:$0]  %s6, 2048, %s78, [#allocation9], 128, 128, 8
    $region29: #{tpu_custom_call.1} parent=1 // pred_fallthru
      _
    // Predicated region
    $region30: #{tpu_custom_call.1} parent=1 // pred_check
      _
    $region31: #{tpu_custom_call.1} parent=1 // pred_check_branch
      %85 = sbr.rel (0) target = $region33
    $region32: #{tpu_custom_call.1} parent=1 // pred_region
      _
    $region33: #{tpu_custom_call.1} parent=1 // pred_fallthru
      _
    // Predicated region
    $region34: #{tpu_custom_call.1} parent=1 // pred_check
      _
    $region35: #{tpu_custom_call.1} parent=1 // pred_check_branch
      %87 = sbr.rel (0) target = $region37
    $region36: #{tpu_custom_call.1} parent=1 // pred_region
      _
    $region37: #{tpu_custom_call.1} parent=1 // pred_fallthru
      _
    // Predicated region
    $region38: #{tpu_custom_call.1} parent=1 // pred_check
      _
    $region39: #{tpu_custom_call.1} parent=1 // pred_check_branch
      %89 = sbr.rel (0) target = $region41
    $region40: #{tpu_custom_call.1} parent=1 // pred_region
      _
    $region41: #{tpu_custom_call.1} parent=1 // pred_fallthru
      _
    // Predicated region
    $region42: #{tpu_custom_call.1} parent=1 // pred_check
      _
    $region43: #{tpu_custom_call.1} parent=1 // pred_check_branch
      %91 = sbr.rel (0) target = $region45
    $region44: #{tpu_custom_call.1} parent=1 // pred_region
      %s93 = ssub.s32 1024, 1024
      %94 = vsyncadd [#allocation12], %s93
      %s95 = sshll.u32 [#allocation11], 4
      %s96 = int_to_ptr.vmem [resolvable:$true] %s95
      %101 = dma.hbm_to_vmem [thread:$0]  %s10, 1024, %s96, [#allocation12], 64, 64, 4
    $region45: #{tpu_custom_call.1} parent=1 // pred_fallthru
      _
    // Predicated region
    $region46: #{tpu_custom_call.1} parent=1 // pred_check
      _
    $region47: #{tpu_custom_call.1} parent=1 // pred_check_branch
      %103 = sbr.rel (0) target = $region49
    $region48: #{tpu_custom_call.1} parent=1 // pred_region
      _
    $region49: #{tpu_custom_call.1} parent=1 // pred_fallthru
      _
    // Predicated region
    $region50: #{tpu_custom_call.1} parent=1 // pred_check
      _
    $region51: #{tpu_custom_call.1} parent=1 // pred_check_branch
      %105 = sbr.rel (0) target = $region53
    $region52: #{tpu_custom_call.1} parent=1 // pred_region
      _
    $region53: #{tpu_custom_call.1} parent=1 // pred_fallthru
      _
    // Predicated region
    $region54: #{tpu_custom_call.1} parent=1 // pred_check
      _
    $region55: #{tpu_custom_call.1} parent=1 // pred_check_branch
      %107 = sbr.rel (0) target = $region57
    $region56: #{tpu_custom_call.1} parent=1 // pred_region
      _
    $region57: #{tpu_custom_call.1} parent=1 // pred_fallthru
      _
    // Predicated region
    $region58: #{tpu_custom_call.1} parent=1 // pred_check
      _
    $region59: #{tpu_custom_call.1} parent=1 // pred_check_branch
      %109 = sbr.rel (0) target = $region61
    $region60: #{tpu_custom_call.1} parent=1 // pred_region
      %110 = dma.done [#allocation3], 128
    $region61: #{tpu_custom_call.1} parent=1 // pred_fallthru
      _
    // Predicated region
    $region62: #{tpu_custom_call.1} parent=1 // pred_check
      _
    $region63: #{tpu_custom_call.1} parent=1 // pred_check_branch
      %112 = sbr.rel (0) target = $region65
    $region64: #{tpu_custom_call.1} parent=1 // pred_region
      %113 = dma.done [#allocation6], 128
    $region65: #{tpu_custom_call.1} parent=1 // pred_fallthru
      _
    // Predicated region
    $region66: #{tpu_custom_call.1} parent=1 // pred_check
      _
    $region67: #{tpu_custom_call.1} parent=1 // pred_check_branch
      %115 = sbr.rel (0) target = $region69
    $region68: #{tpu_custom_call.1} parent=1 // pred_region
      %116 = dma.done [#allocation6], 16
    $region69: #{tpu_custom_call.1} parent=1 // pred_fallthru
      _
    // Predicated region
    $region70: #{tpu_custom_call.1} parent=1 // pred_check
      _
    $region71: #{tpu_custom_call.1} parent=1 // pred_check_branch
      %118 = sbr.rel (0) target = $region73
    $region72: #{tpu_custom_call.1} parent=1 // pred_region
      %119 = dma.done [#allocation9], 16
    $region73: #{tpu_custom_call.1} parent=1 // pred_fallthru
      _
    // Predicated region
    $region74: #{tpu_custom_call.1} parent=1 // pred_check
      _
    $region75: #{tpu_custom_call.1} parent=1 // pred_check_branch
      %121 = sbr.rel (0) target = $region77
    $region76: #{tpu_custom_call.1} parent=1 // pred_region
      %122 = dma.done [#allocation9], 2048
    $region77: #{tpu_custom_call.1} parent=1 // pred_fallthru
      _
    // Predicated region
    $region78: #{tpu_custom_call.1} parent=1 // pred_check
      _
    $region79: #{tpu_custom_call.1} parent=1 // pred_check_branch
      %124 = sbr.rel (0) target = $region81
    $region80: #{tpu_custom_call.1} parent=1 // pred_region
      %125 = dma.done [#allocation12], 1024
    $region81: #{tpu_custom_call.1} parent=1 // pred_fallthru
      _
    %v127 = vld [vmem:[#allocation2] sm:$0xff]
    %v128 = vpack.c.bf16 %v127, %v127
    %v129 = vld [vmem:[%s2] sm:$0xf]
    %v130 = vld [vmem:[%s2 + $0x4] sm:$0xf]
    %v131 = vld [vmem:[%s2 + $0x8] sm:$0xf]
    %v132 = vld [vmem:[%s2 + $0xc] sm:$0xf]
    %v133 = vld [vmem:[%s2 + $0x10] sm:$0xf]
    %v134 = vld [vmem:[%s2 + $0x14] sm:$0xf]
    %v135 = vld [vmem:[%s2 + $0x18] sm:$0xf]
    %v136 = vld [vmem:[%s2 + $0x1c] sm:$0xf]
    %v137 = vld [vmem:[#allocation7] sm:$0x1]
    %v139 = vlaneseq
    %v140 = vshrl.u32 %v139, 7
    %v141 = vsub.s32 0, %v140
    %v142 = vrot.slane %v137, %v141
    %v152 = vunpack.c.l.b16 %v129
    %v153 = vunpack.c.l.b16 %v130
    %v154 = vunpack.c.l.b16 %v131
    %v155 = vunpack.c.l.b16 %v132
    %v156 = vunpack.c.l.b16 %v133
    %v157 = vunpack.c.l.b16 %v134
    %v158 = vunpack.c.l.b16 %v135
    %v159 = vunpack.c.l.b16 %v136
    %v160 = vpack.c.b16 %v153, %v152
    %v161 = vpack.c.b16 %v155, %v154
    %v162 = vpack.c.b16 %v157, %v156
    %v163 = vpack.c.b16 %v159, %v158
    %vm168 = vcmask 523264
    %v170 = vsel %vm168, %v128, 0
    %172 = vmatprep.subr.bf16.mxu0 0
    %173 = vmatpush1.bf16.msra.mxu0 0
    %174 = vmatprep.subr.bf16.mxu0 0
    %175 = vmatpush1.bf16.msra.mxu0 0
    %176 = vmatprep.subr.bf16.mxu0 0
    %177 = vmatpush1.bf16.msra.mxu0 0
    %178 = vmatprep.subr.bf16.mxu0 0
    %179 = vmatpush1.bf16.msra.mxu0 0
    %180 = vmatprep.subr.bf16.mxu0 0
    %181 = vmatpush1.bf16.msra.mxu0 %v163
    %182 = vmatprep.subr.bf16.mxu0 0
    %183 = vmatpush1.bf16.msra.mxu0 %v162
    %184 = vmatprep.subr.bf16.mxu0 0
    %185 = vmatpush1.bf16.msra.mxu0 %v161
    %186 = vmatprep.subr.bf16.mxu0 0
    %187 = vmatpush1.bf16.msra.mxu0 %v160
    %188 = vmatprep.subr.bf16.mxu0 0
    %189 = vmatpush2.bf16.msra.mxu0 0
    %190 = vmatprep.subr.bf16.mxu0 0
    %191 = vmatpush2.bf16.msra.mxu0 0
    %192 = vmatprep.subr.bf16.mxu0 0
    %193 = vmatpush2.bf16.msra.mxu0 0
    %194 = vmatprep.subr.bf16.mxu0 0
    %195 = vmatpush2.bf16.msra.mxu0 0
    %196 = vmatprep.subr.bf16.mxu0 0
    %197 = vmatpush2.bf16.msra.mxu0 0
    %198 = vmatprep.subr.bf16.mxu0 0
    %199 = vmatpush2.bf16.msra.mxu0 0
    %200 = vmatprep.subr.bf16.mxu0 0
    %201 = vmatpush2.bf16.msra.mxu0 0
    %202 = vmatprep.subr.bf16.mxu0 0
    %203 = vmatpush2.bf16.msra.mxu0 0
    %204 = vmatprep.mubr.bf16.mxu0 0
    %205 = vmatmul.mubr.bf16.gmra.mxu0 %v170
    %v206 = vpop.f32.mrf.mxu0
    %v207 = vadd.f32 %v142, %v206
    %v208 = vpop.f32.mrf.mxu0
    %v209 = vpop.f32.mrf.mxu0
    %v210 = vpop.f32.mrf.mxu0
    %211 = vdwg.mxu0
    %v212 = vmax.f32 %v207, 0.0
    %v213 = vpack.c.bf16 %v212, %v212
    %v214 = vld [vmem:[%s4] sm:$0xf]
    %v215 = vld [vmem:[%s4 + $0x4] sm:$0xf]
    %v216 = vld [vmem:[%s4 + $0x8] sm:$0xf]
    %v217 = vld [vmem:[%s4 + $0xc] sm:$0xf]
    %v218 = vld [vmem:[%s4 + $0x10] sm:$0xf]
    %v219 = vld [vmem:[%s4 + $0x14] sm:$0xf]
    %v220 = vld [vmem:[%s4 + $0x18] sm:$0xf]
    %v221 = vld [vmem:[%s4 + $0x1c] sm:$0xf]
    %v222 = vld [vmem:[%s4 + $0x20] sm:$0xf]
    %v223 = vld [vmem:[%s4 + $0x24] sm:$0xf]
    %v224 = vld [vmem:[%s4 + $0x28] sm:$0xf]
    %v225 = vld [vmem:[%s4 + $0x2c] sm:$0xf]
    %v226 = vld [vmem:[%s4 + $0x30] sm:$0xf]
    %v227 = vld [vmem:[%s4 + $0x34] sm:$0xf]
    %v228 = vld [vmem:[%s4 + $0x38] sm:$0xf]
    %v229 = vld [vmem:[%s4 + $0x3c] sm:$0xf]
    %v230 = vld [vmem:[#allocation8] sm:$0x1]
    %v232 = vlaneseq
    %v233 = vshrl.u32 %v232, 7
    %v234 = vsub.s32 0, %v233
    %v235 = vrot.slane %v230, %v234
    %v253 = vunpack.c.l.b16 %v214
    %v254 = vunpack.c.l.b16 %v215
    %v255 = vunpack.c.l.b16 %v216
    %v256 = vunpack.c.l.b16 %v217
    %v257 = vunpack.c.l.b16 %v218
    %v258 = vunpack.c.l.b16 %v219
    %v259 = vunpack.c.l.b16 %v220
    %v260 = vunpack.c.l.b16 %v221
    %v261 = vunpack.c.l.b16 %v222
    %v262 = vunpack.c.l.b16 %v223
    %v263 = vunpack.c.l.b16 %v224
    %v264 = vunpack.c.l.b16 %v225
    %v265 = vunpack.c.l.b16 %v226
    %v266 = vunpack.c.l.b16 %v227
    %v267 = vunpack.c.l.b16 %v228
    %v268 = vunpack.c.l.b16 %v229
    %v269 = vpack.c.b16 %v254, %v253
    %v270 = vpack.c.b16 %v256, %v255
    %v271 = vpack.c.b16 %v258, %v257
    %v272 = vpack.c.b16 %v260, %v259
    %v273 = vpack.c.b16 %v262, %v261
    %v274 = vpack.c.b16 %v264, %v263
    %v275 = vpack.c.b16 %v266, %v265
    %v276 = vpack.c.b16 %v268, %v267
    %285 = vmatprep.subr.bf16.mxu0 0
    %286 = vmatpush1.bf16.msra.mxu0 %v276
    %287 = vmatprep.subr.bf16.mxu0 0
    %288 = vmatpush1.bf16.msra.mxu0 %v275
    %289 = vmatprep.subr.bf16.mxu0 0
    %290 = vmatpush1.bf16.msra.mxu0 %v274
    %291 = vmatprep.subr.bf16.mxu0 0
    %292 = vmatpush1.bf16.msra.mxu0 %v273
    %293 = vmatprep.subr.bf16.mxu0 0
    %294 = vmatpush1.bf16.msra.mxu0 %v272
    %295 = vmatprep.subr.bf16.mxu0 0
    %296 = vmatpush1.bf16.msra.mxu0 %v271
    %297 = vmatprep.subr.bf16.mxu0 0
    %298 = vmatpush1.bf16.msra.mxu0 %v270
    %299 = vmatprep.subr.bf16.mxu0 0
    %300 = vmatpush1.bf16.msra.mxu0 %v269
    %301 = vmatprep.subr.bf16.mxu0 0
    %302 = vmatpush2.bf16.msra.mxu0 0
    %303 = vmatprep.subr.bf16.mxu0 0
    %304 = vmatpush2.bf16.msra.mxu0 0
    %305 = vmatprep.subr.bf16.mxu0 0
    %306 = vmatpush2.bf16.msra.mxu0 0
    %307 = vmatprep.subr.bf16.mxu0 0
    %308 = vmatpush2.bf16.msra.mxu0 0
    %309 = vmatprep.subr.bf16.mxu0 0
    %310 = vmatpush2.bf16.msra.mxu0 0
    %311 = vmatprep.subr.bf16.mxu0 0
    %312 = vmatpush2.bf16.msra.mxu0 0
    %313 = vmatprep.subr.bf16.mxu0 0
    %314 = vmatpush2.bf16.msra.mxu0 0
    %315 = vmatprep.subr.bf16.mxu0 0
    %316 = vmatpush2.bf16.msra.mxu0 0
    %317 = vmatprep.mubr.bf16.mxu0 0
    %318 = vmatmul.mubr.bf16.gmra.mxu0 %v213
    %v319 = vpop.f32.mrf.mxu0
    %v320 = vadd.f32 %v235, %v319
    %v321 = vpop.f32.mrf.mxu0
    %v322 = vpop.f32.mrf.mxu0
    %v323 = vpop.f32.mrf.mxu0
    %324 = vdwg.mxu0
    %v325 = vmax.f32 %v320, 0.0
    %v326 = vpack.c.bf16 %v325, %v325
    %v327 = vld [vmem:[#allocation10] sm:$0xff]
    %v328 = vld [vmem:[#allocation10 + $0x8] sm:$0xff]
    %v329 = vld [vmem:[#allocation10 + $0x10] sm:$0xff]
    %v330 = vld [vmem:[#allocation10 + $0x18] sm:$0xff]
    %v331 = vld [vmem:[#allocation10 + $0x20] sm:$0xff]
    %v332 = vld [vmem:[#allocation10 + $0x28] sm:$0xff]
    %v333 = vld [vmem:[#allocation10 + $0x30] sm:$0xff]
    %v334 = vld [vmem:[#allocation10 + $0x38] sm:$0xff]
    %v335 = vld [vmem:[#allocation10 + $0x40] sm:$0xff]
    %v336 = vld [vmem:[#allocation10 + $0x48] sm:$0xff]
    %v337 = vld [vmem:[#allocation10 + $0x50] sm:$0xff]
    %v338 = vld [vmem:[#allocation10 + $0x58] sm:$0xff]
    %v339 = vld [vmem:[#allocation10 + $0x60] sm:$0xff]
    %v340 = vld [vmem:[#allocation10 + $0x68] sm:$0xff]
    %v341 = vld [vmem:[#allocation10 + $0x70] sm:$0xff]
    %v342 = vld [vmem:[#allocation10 + $0x78] sm:$0xff]
    %v343 = vld [vmem:[%s7] sm:$0x3]
    %v345 = vlaneseq
    %v346 = vshrl.u32 %v345, 7
    %v347 = vsub.s32 0, %v346
    %v348 = vrot.slane %v343, %v347
    %v349 = vlaneseq
    %v350 = vshrl.u32 %v349, 7
    %v351 = vsub.s32 1, %v350
    %v352 = vrot.slane %v343, %v351
    %v371 = vunpack.c.l.b16 %v327
    %v372 = vunpack.c.h.b16 %v327
    %v373 = vunpack.c.l.b16 %v328
    %v374 = vunpack.c.h.b16 %v328
    %v375 = vunpack.c.l.b16 %v329
    %v376 = vunpack.c.h.b16 %v329
    %v377 = vunpack.c.l.b16 %v330
    %v378 = vunpack.c.h.b16 %v330
    %v379 = vunpack.c.l.b16 %v331
    %v380 = vunpack.c.h.b16 %v331
    %v381 = vunpack.c.l.b16 %v332
    %v382 = vunpack.c.h.b16 %v332
    %v383 = vunpack.c.l.b16 %v333
    %v384 = vunpack.c.h.b16 %v333
    %v385 = vunpack.c.l.b16 %v334
    %v386 = vunpack.c.h.b16 %v334
    %v387 = vunpack.c.l.b16 %v335
    %v388 = vunpack.c.h.b16 %v335
    %v389 = vunpack.c.l.b16 %v336
    %v390 = vunpack.c.h.b16 %v336
    %v391 = vunpack.c.l.b16 %v337
    %v392 = vunpack.c.h.b16 %v337
    %v393 = vunpack.c.l.b16 %v338
    %v394 = vunpack.c.h.b16 %v338
    %v395 = vunpack.c.l.b16 %v339
    %v396 = vunpack.c.h.b16 %v339
    %v397 = vunpack.c.l.b16 %v340
    %v398 = vunpack.c.h.b16 %v340
    %v399 = vunpack.c.l.b16 %v341
    %v400 = vunpack.c.h.b16 %v341
    %v401 = vunpack.c.l.b16 %v342
    %v402 = vunpack.c.h.b16 %v342
    %v403 = vpack.c.b16 %v373, %v371
    %v404 = vpack.c.b16 %v374, %v372
    %v405 = vpack.c.b16 %v377, %v375
    %v406 = vpack.c.b16 %v378, %v376
    %v407 = vpack.c.b16 %v381, %v379
    %v408 = vpack.c.b16 %v382, %v380
    %v409 = vpack.c.b16 %v385, %v383
    %v410 = vpack.c.b16 %v386, %v384
    %v411 = vpack.c.b16 %v389, %v387
    %v412 = vpack.c.b16 %v390, %v388
    %v413 = vpack.c.b16 %v393, %v391
    %v414 = vpack.c.b16 %v394, %v392
    %v415 = vpack.c.b16 %v397, %v395
    %v416 = vpack.c.b16 %v398, %v396
    %v417 = vpack.c.b16 %v401, %v399
    %v418 = vpack.c.b16 %v402, %v400
    %435 = vmatprep.subr.bf16.mxu0 %v418
    %436 = vmatpush1.bf16.msra.mxu0 %v417
    %437 = vmatprep.subr.bf16.mxu0 %v416
    %438 = vmatpush1.bf16.msra.mxu0 %v415
    %439 = vmatprep.subr.bf16.mxu0 %v414
    %440 = vmatpush1.bf16.msra.mxu0 %v413
    %441 = vmatprep.subr.bf16.mxu0 %v412
    %442 = vmatpush1.bf16.msra.mxu0 %v411
    %443 = vmatprep.subr.bf16.mxu0 %v410
    %444 = vmatpush1.bf16.msra.mxu0 %v409
    %445 = vmatprep.subr.bf16.mxu0 %v408
    %446 = vmatpush1.bf16.msra.mxu0 %v407
    %447 = vmatprep.subr.bf16.mxu0 %v406
    %448 = vmatpush1.bf16.msra.mxu0 %v405
    %449 = vmatprep.subr.bf16.mxu0 %v404
    %450 = vmatpush1.bf16.msra.mxu0 %v403
    %451 = vmatprep.subr.bf16.mxu0 0
    %452 = vmatpush2.bf16.msra.mxu0 0
    %453 = vmatprep.subr.bf16.mxu0 0
    %454 = vmatpush2.bf16.msra.mxu0 0
    %455 = vmatprep.subr.bf16.mxu0 0
    %456 = vmatpush2.bf16.msra.mxu0 0
    %457 = vmatprep.subr.bf16.mxu0 0
    %458 = vmatpush2.bf16.msra.mxu0 0
    %459 = vmatprep.subr.bf16.mxu0 0
    %460 = vmatpush2.bf16.msra.mxu0 0
    %461 = vmatprep.subr.bf16.mxu0 0
    %462 = vmatpush2.bf16.msra.mxu0 0
    %463 = vmatprep.subr.bf16.mxu0 0
    %464 = vmatpush2.bf16.msra.mxu0 0
    %465 = vmatprep.subr.bf16.mxu0 0
    %466 = vmatpush2.bf16.msra.mxu0 0
    %467 = vmatprep.mubr.bf16.mxu0 0
    %468 = vmatmul.mubr.bf16.gmra.mxu0 %v326
    %v469 = vpop.f32.mrf.mxu0
    %v470 = vadd.f32 %v348, %v469
    %v471 = vpop.f32.mrf.mxu0
    %v472 = vadd.f32 %v352, %v471
    %v473 = vpop.f32.mrf.mxu0
    %v474 = vpop.f32.mrf.mxu0
    %475 = vdwg.mxu0
    %vm476 = vcmask 130048
    %477 = vst.msk [vmem:[#allocation14] sm:$0xff] %vm476, %v470
    %478 = vst.msk [vmem:[#allocation16] sm:$0xff] %vm476, %v472
    %v479 = vmul.f32 %v472, 0.5
    %v480 = vmul.f32 %v479, 1.442695
    %v481 = vpow.pop %v480
    %v482 = vld [vmem:[#allocation5] sm:$0xff]
    %v483 = vmul.f32 %v482, %v481
    %v484 = vadd.f32 %v470, %v483
    %v485 = vpack.c.bf16 %v484, %v484
    %v486 = vld [vmem:[%s8] sm:$0xf]
    %v487 = vld [vmem:[%s8 + $0x4] sm:$0xf]
    %v488 = vld [vmem:[%s9] sm:$0x1]
    %v490 = vlaneseq
    %v491 = vshrl.u32 %v490, 7
    %v492 = vsub.s32 0, %v491
    %v493 = vrot.slane %v488, %v492
    %v497 = vunpack.c.l.b16 %v486
    %v498 = vunpack.c.l.b16 %v487
    %v499 = vpack.c.b16 %v498, %v497
    %v502 = vsel %vm476, %v485, 0
    %504 = vmatprep.subr.bf16.mxu0 0
    %505 = vmatpush1.bf16.msra.mxu0 0
    %506 = vmatprep.subr.bf16.mxu0 0
    %507 = vmatpush1.bf16.msra.mxu0 0
    %508 = vmatprep.subr.bf16.mxu0 0
    %509 = vmatpush1.bf16.msra.mxu0 0
    %510 = vmatprep.subr.bf16.mxu0 0
    %511 = vmatpush1.bf16.msra.mxu0 0
    %512 = vmatprep.subr.bf16.mxu0 0
    %513 = vmatpush1.bf16.msra.mxu0 0
    %514 = vmatprep.subr.bf16.mxu0 0
    %515 = vmatpush1.bf16.msra.mxu0 0
    %516 = vmatprep.subr.bf16.mxu0 0
    %517 = vmatpush1.bf16.msra.mxu0 0
    %518 = vmatprep.subr.bf16.mxu0 0
    %519 = vmatpush1.bf16.msra.mxu0 %v499
    %520 = vmatprep.subr.bf16.mxu0 0
    %521 = vmatpush2.bf16.msra.mxu0 0
    %522 = vmatprep.subr.bf16.mxu0 0
    %523 = vmatpush2.bf16.msra.mxu0 0
    %524 = vmatprep.subr.bf16.mxu0 0
    %525 = vmatpush2.bf16.msra.mxu0 0
    %526 = vmatprep.subr.bf16.mxu0 0
    %527 = vmatpush2.bf16.msra.mxu0 0
    %528 = vmatprep.subr.bf16.mxu0 0
    %529 = vmatpush2.bf16.msra.mxu0 0
    %530 = vmatprep.subr.bf16.mxu0 0
    %531 = vmatpush2.bf16.msra.mxu0 0
    %532 = vmatprep.subr.bf16.mxu0 0
    %533 = vmatpush2.bf16.msra.mxu0 0
    %534 = vmatprep.subr.bf16.mxu0 0
    %535 = vmatpush2.bf16.msra.mxu0 0
    %536 = vmatprep.mubr.bf16.mxu0 0
    %537 = vmatmul.mubr.bf16.gmra.mxu0 %v502
    %v538 = vpop.f32.mrf.mxu0
    %v539 = vadd.f32 %v493, %v538
    %v540 = vpop.f32.mrf.mxu0
    %v541 = vpop.f32.mrf.mxu0
    %v542 = vpop.f32.mrf.mxu0
    %543 = vdwg.mxu0
    %v544 = vmax.f32 %v539, 0.0
    %v545 = vpack.c.bf16 %v544, %v544
    %v546 = vld [vmem:[#allocation11] sm:$0xf]
    %v547 = vld [vmem:[#allocation11 + $0x4] sm:$0xf]
    %v548 = vld [vmem:[#allocation11 + $0x8] sm:$0xf]
    %v549 = vld [vmem:[#allocation11 + $0xc] sm:$0xf]
    %v550 = vld [vmem:[#allocation11 + $0x10] sm:$0xf]
    %v551 = vld [vmem:[#allocation11 + $0x14] sm:$0xf]
    %v552 = vld [vmem:[#allocation11 + $0x18] sm:$0xf]
    %v553 = vld [vmem:[#allocation11 + $0x1c] sm:$0xf]
    %v554 = vld [vmem:[#allocation11 + $0x20] sm:$0xf]
    %v555 = vld [vmem:[#allocation11 + $0x24] sm:$0xf]
    %v556 = vld [vmem:[#allocation11 + $0x28] sm:$0xf]
    %v557 = vld [vmem:[#allocation11 + $0x2c] sm:$0xf]
    %v558 = vld [vmem:[#allocation11 + $0x30] sm:$0xf]
    %v559 = vld [vmem:[#allocation11 + $0x34] sm:$0xf]
    %v560 = vld [vmem:[#allocation11 + $0x38] sm:$0xf]
    %v561 = vld [vmem:[#allocation11 + $0x3c] sm:$0xf]
    %v562 = vld [vmem:[%s11] sm:$0x1]
    %v564 = vlaneseq
    %v565 = vshrl.u32 %v564, 7
    %v566 = vsub.s32 0, %v565
    %v567 = vrot.slane %v562, %v566
    %v585 = vunpack.c.l.b16 %v546
    %v586 = vunpack.c.l.b16 %v547
    %v587 = vunpack.c.l.b16 %v548
    %v588 = vunpack.c.l.b16 %v549
    %v589 = vunpack.c.l.b16 %v550
    %v590 = vunpack.c.l.b16 %v551
    %v591 = vunpack.c.l.b16 %v552
    %v592 = vunpack.c.l.b16 %v553
    %v593 = vunpack.c.l.b16 %v554
    %v594 = vunpack.c.l.b16 %v555
    %v595 = vunpack.c.l.b16 %v556
    %v596 = vunpack.c.l.b16 %v557
    %v597 = vunpack.c.l.b16 %v558
    %v598 = vunpack.c.l.b16 %v559
    %v599 = vunpack.c.l.b16 %v560
    %v600 = vunpack.c.l.b16 %v561
    %v601 = vpack.c.b16 %v586, %v585
    %v602 = vpack.c.b16 %v588, %v587
    %v603 = vpack.c.b16 %v590, %v589
    %v604 = vpack.c.b16 %v592, %v591
    %v605 = vpack.c.b16 %v594, %v593
    %v606 = vpack.c.b16 %v596, %v595
    %v607 = vpack.c.b16 %v598, %v597
    %v608 = vpack.c.b16 %v600, %v599
    %617 = vmatprep.subr.bf16.mxu0 0
    %618 = vmatpush1.bf16.msra.mxu0 %v608
    %619 = vmatprep.subr.bf16.mxu0 0
    %620 = vmatpush1.bf16.msra.mxu0 %v607
    %621 = vmatprep.subr.bf16.mxu0 0
    %622 = vmatpush1.bf16.msra.mxu0 %v606
    %623 = vmatprep.subr.bf16.mxu0 0
    %624 = vmatpush1.bf16.msra.mxu0 %v605
    %625 = vmatprep.subr.bf16.mxu0 0
    %626 = vmatpush1.bf16.msra.mxu0 %v604
    %627 = vmatprep.subr.bf16.mxu0 0
    %628 = vmatpush1.bf16.msra.mxu0 %v603
    %629 = vmatprep.subr.bf16.mxu0 0
    %630 = vmatpush1.bf16.msra.mxu0 %v602
    %631 = vmatprep.subr.bf16.mxu0 0
    %632 = vmatpush1.bf16.msra.mxu0 %v601
    %633 = vmatprep.subr.bf16.mxu0 0
    %634 = vmatpush2.bf16.msra.mxu0 0
    %635 = vmatprep.subr.bf16.mxu0 0
    %636 = vmatpush2.bf16.msra.mxu0 0
    %637 = vmatprep.subr.bf16.mxu0 0
    %638 = vmatpush2.bf16.msra.mxu0 0
    %639 = vmatprep.subr.bf16.mxu0 0
    %640 = vmatpush2.bf16.msra.mxu0 0
    %641 = vmatprep.subr.bf16.mxu0 0
    %642 = vmatpush2.bf16.msra.mxu0 0
    %643 = vmatprep.subr.bf16.mxu0 0
    %644 = vmatpush2.bf16.msra.mxu0 0
    %645 = vmatprep.subr.bf16.mxu0 0
    %646 = vmatpush2.bf16.msra.mxu0 0
    %647 = vmatprep.subr.bf16.mxu0 0
    %648 = vmatpush2.bf16.msra.mxu0 0
    %649 = vmatprep.mubr.bf16.mxu0 0
    %650 = vmatmul.mubr.bf16.gmra.mxu0 %v545
    %v651 = vpop.f32.mrf.mxu0
    %v652 = vadd.f32 %v567, %v651
    %v653 = vpop.f32.mrf.mxu0
    %v654 = vpop.f32.mrf.mxu0
    %v655 = vpop.f32.mrf.mxu0
    %656 = vdwg.mxu0
    %v657 = vmax.f32 %v652, 0.0
    %v658 = vpack.c.bf16 %v657, %v657
    %v659 = vld [vmem:[%s12] sm:$0xf]
    %v660 = vld [vmem:[%s12 + $0x4] sm:$0xf]
    %v661 = vld [vmem:[%s12 + $0x8] sm:$0xf]
    %v662 = vld [vmem:[%s12 + $0xc] sm:$0xf]
    %v663 = vld [vmem:[%s12 + $0x10] sm:$0xf]
    %v664 = vld [vmem:[%s12 + $0x14] sm:$0xf]
    %v665 = vld [vmem:[%s12 + $0x18] sm:$0xf]
    %v666 = vld [vmem:[%s12 + $0x1c] sm:$0xf]
    %v667 = vld [vmem:[%s12 + $0x20] sm:$0xf]
    %v668 = vld [vmem:[%s12 + $0x24] sm:$0xf]
    %v669 = vld [vmem:[%s12 + $0x28] sm:$0xf]
    %v670 = vld [vmem:[%s12 + $0x2c] sm:$0xf]
    %v671 = vld [vmem:[%s12 + $0x30] sm:$0xf]
    %v672 = vld [vmem:[%s12 + $0x34] sm:$0xf]
    %v673 = vld [vmem:[%s12 + $0x38] sm:$0xf]
    %v674 = vld [vmem:[%s12 + $0x3c] sm:$0xf]
    %v675 = vld [vmem:[%s13] sm:$0x1]
    %v677 = vlaneseq
    %v678 = vshrl.u32 %v677, 7
    %v679 = vsub.s32 0, %v678
    %v680 = vrot.slane %v675, %v679
    %v698 = vunpack.c.l.b16 %v659
    %v699 = vunpack.c.l.b16 %v660
    %v700 = vunpack.c.l.b16 %v661
    %v701 = vunpack.c.l.b16 %v662
    %v702 = vunpack.c.l.b16 %v663
    %v703 = vunpack.c.l.b16 %v664
    %v704 = vunpack.c.l.b16 %v665
    %v705 = vunpack.c.l.b16 %v666
    %v706 = vunpack.c.l.b16 %v667
    %v707 = vunpack.c.l.b16 %v668
    %v708 = vunpack.c.l.b16 %v669
    %v709 = vunpack.c.l.b16 %v670
    %v710 = vunpack.c.l.b16 %v671
    %v711 = vunpack.c.l.b16 %v672
    %v712 = vunpack.c.l.b16 %v673
    %v713 = vunpack.c.l.b16 %v674
    %v714 = vpack.c.b16 %v699, %v698
    %v715 = vpack.c.b16 %v701, %v700
    %v716 = vpack.c.b16 %v703, %v702
    %v717 = vpack.c.b16 %v705, %v704
    %v718 = vpack.c.b16 %v707, %v706
    %v719 = vpack.c.b16 %v709, %v708
    %v720 = vpack.c.b16 %v711, %v710
    %v721 = vpack.c.b16 %v713, %v712
    %730 = vmatprep.subr.bf16.mxu0 0
    %731 = vmatpush1.bf16.msra.mxu0 %v721
    %732 = vmatprep.subr.bf16.mxu0 0
    %733 = vmatpush1.bf16.msra.mxu0 %v720
    %734 = vmatprep.subr.bf16.mxu0 0
    %735 = vmatpush1.bf16.msra.mxu0 %v719
    %736 = vmatprep.subr.bf16.mxu0 0
    %737 = vmatpush1.bf16.msra.mxu0 %v718
    %738 = vmatprep.subr.bf16.mxu0 0
    %739 = vmatpush1.bf16.msra.mxu0 %v717
    %740 = vmatprep.subr.bf16.mxu0 0
    %741 = vmatpush1.bf16.msra.mxu0 %v716
    %742 = vmatprep.subr.bf16.mxu0 0
    %743 = vmatpush1.bf16.msra.mxu0 %v715
    %744 = vmatprep.subr.bf16.mxu0 0
    %745 = vmatpush1.bf16.msra.mxu0 %v714
    %746 = vmatprep.subr.bf16.mxu0 0
    %747 = vmatpush2.bf16.msra.mxu0 0
    %748 = vmatprep.subr.bf16.mxu0 0
    %749 = vmatpush2.bf16.msra.mxu0 0
    %750 = vmatprep.subr.bf16.mxu0 0
    %751 = vmatpush2.bf16.msra.mxu0 0
    %752 = vmatprep.subr.bf16.mxu0 0
    %753 = vmatpush2.bf16.msra.mxu0 0
    %754 = vmatprep.subr.bf16.mxu0 0
    %755 = vmatpush2.bf16.msra.mxu0 0
    %756 = vmatprep.subr.bf16.mxu0 0
    %757 = vmatpush2.bf16.msra.mxu0 0
    %758 = vmatprep.subr.bf16.mxu0 0
    %759 = vmatpush2.bf16.msra.mxu0 0
    %760 = vmatprep.subr.bf16.mxu0 0
    %761 = vmatpush2.bf16.msra.mxu0 0
    %762 = vmatprep.mubr.bf16.mxu0 0
    %763 = vmatmul.mubr.bf16.gmra.mxu0 %v658
    %v764 = vpop.f32.mrf.mxu0
    %v765 = vadd.f32 %v680, %v764
    %v766 = vpop.f32.mrf.mxu0
    %v767 = vpop.f32.mrf.mxu0
    %v768 = vpop.f32.mrf.mxu0
    %769 = vdwg.mxu0
    %v770 = vsub.f32 0.0, %v765
    %v771 = vmul.f32 %v770, 1.442695
    %v772 = vpow.pop %v771
    %v773 = vadd.f32 %v772, 1.0
    %v774 = vrcp.pop %v773
    %775 = vst.msk [vmem:[#allocation13] sm:$0xff] %vm168, %v774
    // Predicated region
    $region82: #{tpu_custom_call.1} parent=1 // pred_check
      _
    $region83: #{tpu_custom_call.1} parent=1 // pred_check_branch
      %777 = sbr.rel (0) target = $region85
    $region84: #{tpu_custom_call.1} parent=1 // pred_region
      %s779 = ssub.s32 128, 128
      %780 = vsyncadd [#allocation4], %s779
      %s782 = sshll.u32 [#allocation13], 4
      %s783 = int_to_ptr.vmem [resolvable:$true] %s782
      %785 = dma.vmem_to_hbm [thread:$0]  %s783, 128, %s14, [#allocation4]
    $region85: #{tpu_custom_call.1} parent=1 // pred_fallthru
      _
    // Predicated region
    $region86: #{tpu_custom_call.1} parent=1 // pred_check
      _
    $region87: #{tpu_custom_call.1} parent=1 // pred_check_branch
      %787 = sbr.rel (0) target = $region89
    $region88: #{tpu_custom_call.1} parent=1 // pred_region
      %s789 = ssub.s32 128, 128
      %790 = vsyncadd [#allocation15], %s789
      %s792 = sshll.u32 [#allocation14], 4
      %s793 = int_to_ptr.vmem [resolvable:$true] %s792
      %795 = dma.vmem_to_hbm [thread:$0]  %s793, 128, %s15, [#allocation15]
    $region89: #{tpu_custom_call.1} parent=1 // pred_fallthru
      _
    // Predicated region
    $region90: #{tpu_custom_call.1} parent=1 // pred_check
      _
    $region91: #{tpu_custom_call.1} parent=1 // pred_check_branch
      %797 = sbr.rel (0) target = $region93
    $region92: #{tpu_custom_call.1} parent=1 // pred_region
      %s799 = ssub.s32 128, 128
      %800 = vsyncadd [#allocation15], %s799
      %s802 = sshll.u32 [#allocation16], 4
      %s803 = int_to_ptr.vmem [resolvable:$true] %s802
      %805 = dma.vmem_to_hbm [thread:$0]  %s803, 128, %s16, [#allocation15]
    $region93: #{tpu_custom_call.1} parent=1 // pred_fallthru
      _
    // Predicated region
    $region94: #{tpu_custom_call.1} parent=1 // pred_check
      _
    $region95: #{tpu_custom_call.1} parent=1 // pred_check_branch
      %807 = sbr.rel (0) target = $region97
    $region96: #{tpu_custom_call.1} parent=1 // pred_region
      %808 = dma.done [#allocation4], 128
    $region97: #{tpu_custom_call.1} parent=1 // pred_fallthru
      _
    // Predicated region
    $region98: #{tpu_custom_call.1} parent=1 // pred_check
      _
    $region99: #{tpu_custom_call.1} parent=1 // pred_check_branch
      %810 = sbr.rel (0) target = $region101
    $region100: #{tpu_custom_call.1} parent=1 // pred_region
      %811 = dma.done [#allocation15], 128
    $region101: #{tpu_custom_call.1} parent=1 // pred_fallthru
      _
    // Predicated region
    $region102: #{tpu_custom_call.1} parent=1 // pred_check
      _
    $region103: #{tpu_custom_call.1} parent=1 // pred_check_branch
      %813 = sbr.rel (0) target = $region105
    $region104: #{tpu_custom_call.1} parent=1 // pred_region
      %814 = dma.done [#allocation15], 128
    $region105: #{tpu_custom_call.1} parent=1 // pred_fallthru
      _
    %815 = vsyncpa [#allocation3], 1
    %816 = vsyncpa [#allocation6], 1
    %817 = vsyncpa [#allocation9], 1
    %818 = vsyncpa [#allocation12], 1
    %819 = vsyncpa [#allocation4], 1
    %820 = vsyncpa [#allocation15], 1

</llo_original>
